<compile_context>
chip_gen: v7x
topology: tpu7x:2x2x1
jax: 0.10.0
libtpu: 0.0.40
codegen_flags: <defaults>
</compile_context>

<pallas_src>
import functools

import jax
import jax.numpy as jnp
from jax.experimental import pallas as pl
from jax.experimental.pallas import tpu as pltpu


def _leaky_relu(x, slope=0.02):
    # Equivalent to where(x > 0, x, slope * x) ONLY because 0 < slope < 1.
    return jnp.maximum(x, slope * x)


def generator_mlp_kernel(
    pts_ref,            # (1, point_dim, tn) f32   query points, transposed
    zt_ref,             # (1, gf*8, 1)       f32   per-batch  z @ W1_z + b1
    w1_ref,             # (gf*8, point_dim)  bf16  W1_points^T
    w2_ref,             # (gf*8, gf*8)       bf16
    w3_ref,             # (gf*8, gf*8)       bf16
    w4_ref,             # (gf*4, gf*8)       bf16
    w5_ref,             # (gf*2, gf*4)       bf16
    w6_ref,             # (gf,   gf*2)       bf16
    bpack_ref,          # (gf*8, 5)          f32   biases of layers 2..6 (zero padded)
    w7_ref,             # (gf, 1)            f32
    b7_ref,             # (1, 1)             f32
    o_ref,              # (1, 1, tn)
):
    """Fused 7-layer MLP on one (batch, row-tile).  Transposed layout:
    activations are (features, rows) so the result is a lane-dense row."""
    pts = pts_ref[0].astype(jnp.bfloat16)     # (point_dim, tn)
    zt = zt_ref[0]                            # (gf*8, 1) f32, broadcasts over lanes

    # Layer 1 on the MXU (bf16 x bf16 -> f32 accumulate); b1 and the z
    # contribution are pre-folded into `zt`.
    h = _leaky_relu(
        jnp.dot(w1_ref[...], pts, preferred_element_type=jnp.float32) + zt)

    # Layers 2..6: bf16 matmul, f32 accumulation / elementwise.
    b_all = bpack_ref[...]                    # (gf*8, 5) f32
    for j, w_ref in enumerate((w2_ref, w3_ref, w4_ref, w5_ref, w6_ref)):
        w = w_ref[...]                        # (M_out, M_in) bf16
        b = b_all[: w.shape[0], j:j + 1]      # (M_out, 1) f32, static slice
        h = _leaky_relu(
            jnp.dot(w, h.astype(jnp.bfloat16),
                    preferred_element_type=jnp.float32) + b)

    # Layer 7 (gf -> 1) on VPU/XLU in f32: multiply + sublane reduce -> (1, tn).
    l7 = jnp.sum(h * w7_ref[...], axis=0, keepdims=True) + b7_ref[...]

    # torch.max(torch.min(l7, 0.01*l7 + 0.99), 0.01*l7)
    out = jnp.maximum(jnp.minimum(l7, l7 * 0.01 + 0.99), l7 * 0.01)
    o_ref[0] = out.astype(o_ref.dtype)


def init_generator_params(key, z_size, point_dim, gf_dim, dtype=jnp.float32):
    """Deterministic init matching the PyTorch __init__ (normal std=0.02,
    zero bias; last layer mean=1e-5).  Weights stored as (in, out)."""
    dims_in = [z_size + point_dim, gf_dim * 8, gf_dim * 8, gf_dim * 8,
               gf_dim * 4, gf_dim * 2, gf_dim * 1]
    dims_out = [gf_dim * 8, gf_dim * 8, gf_dim * 8, gf_dim * 4,
                gf_dim * 2, gf_dim * 1, 1]
    means = [0.0] * 6 + [1e-5]
    params = []
    keys = jax.random.split(key, 7)
    for k, di, do, mu in zip(keys, dims_in, dims_out, means):
        w = mu + 0.02 * jax.random.normal(k, (di, do), dtype=dtype)
        b = jnp.zeros((1, do), dtype=dtype)
        params.append((w, b))
    return params


def generator_forward(points, z, params, *, tile_rows=8192,
                      vmem_limit_bytes=48 * 1024 * 1024):
    """points: (B, N, point_dim) f32; z: (B, z_size) f32 -> (B, N, 1) f32."""
    B, N, point_dim = points.shape
    ws = [w for w, _ in params]
    bs = [b for _, b in params]
    gf8 = ws[0].shape[1]

    # Row tile: multiple of 128 (lane width); pad N up to a whole tile.
    tn = min(int(tile_rows), pl.cdiv(N, 128) * 128)
    tn = max(128, (tn // 128) * 128)
    n_tiles = pl.cdiv(N, tn)
    # v7x has 2 TensorCores: keep >= 2 parallel grid steps when possible so
    # both cores stay busy (no-op on v5e/v6e, which have a single TC).
    if B * n_tiles < 2 and N > 128:
        tn = max(128, pl.cdiv(pl.cdiv(N, 2), 128) * 128)
        n_tiles = pl.cdiv(N, tn)
    n_pad = n_tiles * tn

    # Per-batch layer-1 z contribution (folds in b1), kept in f32: (B, gf*8, 1).
    z_term = (jnp.dot(z, ws[0][point_dim:, :]) + bs[0]).reshape(B, gf8, 1)
    z_term = z_term.astype(jnp.float32)

    # Weights for the MXU path: transposed and pre-cast to bf16 in the wrapper
    # (halves weight VMEM/DMA and removes per-step cast ops).
    w1p_t = ws[0][:point_dim, :].T.astype(jnp.bfloat16)    # (gf*8, point_dim)
    mid_ws = [ws[k].T.astype(jnp.bfloat16) for k in range(1, 6)]

    # Pack the five mid-layer biases into one (gf*8, 5) f32 block (zero padded)
    # instead of five separate lane-padded (M, 1) inputs.
    b_pack = jnp.zeros((gf8, 5), dtype=jnp.float32)
    for j in range(5):
        bj = bs[j + 1].reshape(-1).astype(jnp.float32)
        b_pack = b_pack.at[: bj.shape[0], j].set(bj)

    w7_col = ws[6].reshape(-1, 1).astype(jnp.float32)       # (gf, 1)
    b7 = bs[6].reshape(1, 1).astype(jnp.float32)            # (1, 1)

    # Transposed points (features on sublanes, rows on lanes), padded rows.
    pts_t = jnp.swapaxes(points, 1, 2)                      # (B, point_dim, N)
    if n_pad != N:
        pts_t = jnp.pad(pts_t, ((0, 0), (0, 0), (0, n_pad - N)))

    def const_spec(arr):
        nd = arr.ndim
        return pl.BlockSpec(arr.shape, lambda b, i, nd=nd: (0,) * nd)

    in_specs = [
        pl.BlockSpec((1, point_dim, tn), lambda b, i: (b, 0, i)),
        pl.BlockSpec((1, gf8, 1), lambda b, i: (b, 0, 0)),
        const_spec(w1p_t),
        *[const_spec(w) for w in mid_ws],
        const_spec(b_pack),
        const_spec(w7_col),
        const_spec(b7),
    ]
    flat_args = [pts_t, z_term, w1p_t, *mid_ws, b_pack, w7_col, b7]

    # Lane-dense output: one (1, tn) row per grid step (unmasked vst's).
    out_spec = pl.BlockSpec((1, 1, tn), lambda b, i: (b, 0, i))

    out = pl.pallas_call(
        generator_mlp_kernel,
        out_shape=jax.ShapeDtypeStruct((B, 1, n_pad), points.dtype),
        grid_spec=pltpu.PrefetchScalarGridSpec(
            num_scalar_prefetch=0,
            grid=(B, n_tiles),
            in_specs=in_specs,
            out_specs=out_spec,
        ),
        compiler_params=pltpu.CompilerParams(
            dimension_semantics=("parallel", "parallel"),
            vmem_limit_bytes=vmem_limit_bytes,
        ),
    )(*flat_args)

    return out.reshape(B, n_pad)[:, :N].reshape(B, N, 1)


def generator_reference(points, z, params):
    """Pure-JAX f32 reference (mirrors the PyTorch forward exactly)."""
    B, N, _ = points.shape
    z_size = z.shape[-1]
    zs = jnp.broadcast_to(z[:, None, :], (B, N, z_size))
    h = jnp.concatenate([points, zs], axis=2)
    for i, (w, b) in enumerate(params):
        h = jnp.dot(h, w) + b[0]
        if i < 6:
            h = jnp.where(h > 0, h, 0.02 * h)
    return jnp.maximum(jnp.minimum(h, h * 0.01 + 0.99), h * 0.01)


if __name__ == "__main__":
    # Small config consistent with the module: z_size=32, point_dim=3, gf_dim=16.
    z_size, point_dim, gf_dim = 32, 3, 16
    B, N = 2, 200  # N % tile != 0 -> exercises the padded last tile

    key = jax.random.PRNGKey(0)
    k_pts, k_z, k_params = jax.random.split(key, 3)

    points = jax.random.uniform(
        k_pts, (B, N, point_dim), dtype=jnp.float32, minval=-0.5, maxval=0.5
    )
    z = jax.random.normal(k_z, (B, z_size), dtype=jnp.float32)
    params = init_generator_params(k_params, z_size, point_dim, gf_dim)

    ref = generator_reference(points, z, params)

    # Small tile so the grid has multiple steps (exercises multi-tile path);
    # production uses the default tile_rows=8192.
    fwd_small = jax.jit(functools.partial(generator_forward, tile_rows=128))
    out_small = jax.block_until_ready(fwd_small(points, z, params))
    assert out_small.shape == (B, N, 1), out_small.shape
    assert jnp.allclose(out_small, ref, atol=5e-4, rtol=5e-3), (
        float(jnp.max(jnp.abs(out_small - ref)))
    )

    # Default-tile path (single row tile per batch element).
    fwd = jax.jit(generator_forward)
    out = jax.block_until_ready(fwd(points, z, params))
    assert out.shape == (B, N, 1), out.shape
    assert jnp.allclose(out, ref, atol=5e-4, rtol=5e-3), (
        float(jnp.max(jnp.abs(out - ref)))
    )

    print("KERNEL_OK")
</pallas_src>

<mosaic_0001>
module attributes {stable_mosaic.version = 11 : i64} {
  func.func @generator_mlp_kernel(%arg0: i32, %arg1: i32, %arg2: memref<1x3x128xf32, #tpu.memory_space<vmem>>, %arg3: memref<1x128x1xf32, #tpu.memory_space<vmem>>, %arg4: memref<128x3xbf16, #tpu.memory_space<vmem>>, %arg5: memref<128x128xbf16, #tpu.memory_space<vmem>>, %arg6: memref<128x128xbf16, #tpu.memory_space<vmem>>, %arg7: memref<64x128xbf16, #tpu.memory_space<vmem>>, %arg8: memref<32x64xbf16, #tpu.memory_space<vmem>>, %arg9: memref<16x32xbf16, #tpu.memory_space<vmem>>, %arg10: memref<128x5xf32, #tpu.memory_space<vmem>>, %arg11: memref<16x1xf32, #tpu.memory_space<vmem>>, %arg12: memref<1x1xf32, #tpu.memory_space<vmem>>, %arg13: memref<1x1x128xf32, #tpu.memory_space<vmem>>) attributes {dimension_semantics = [#tpu.dimension_semantics<parallel>, #tpu.dimension_semantics<parallel>], iteration_bounds = array<i64: 2, 2>, scalar_prefetch = 0 : i64, scratch_operands = 0 : i64, tpu.core_type = #tpu.core_type<tc>, window_params = [{transform_indices = @transform_0, window_bounds = array<i64: 1, 3, 128>}, {transform_indices = @transform_1, window_bounds = array<i64: 1, 128, 1>}, {pipeline_mode = #tpu.pipeline_mode<synchronous>, transform_indices = @transform_2, window_bounds = array<i64: 128, 3>}, {pipeline_mode = #tpu.pipeline_mode<synchronous>, transform_indices = @transform_3, window_bounds = array<i64: 128, 128>}, {pipeline_mode = #tpu.pipeline_mode<synchronous>, transform_indices = @transform_4, window_bounds = array<i64: 128, 128>}, {pipeline_mode = #tpu.pipeline_mode<synchronous>, transform_indices = @transform_5, window_bounds = array<i64: 64, 128>}, {pipeline_mode = #tpu.pipeline_mode<synchronous>, transform_indices = @transform_6, window_bounds = array<i64: 32, 64>}, {pipeline_mode = #tpu.pipeline_mode<synchronous>, transform_indices = @transform_7, window_bounds = array<i64: 16, 32>}, {pipeline_mode = #tpu.pipeline_mode<synchronous>, transform_indices = @transform_8, window_bounds = array<i64: 128, 5>}, {pipeline_mode = #tpu.pipeline_mode<synchronous>, transform_indices = @transform_9, window_bounds = array<i64: 16, 1>}, {pipeline_mode = #tpu.pipeline_mode<synchronous>, transform_indices = @transform_10, window_bounds = array<i64: 1, 1>}, {transform_indices = @transform_11, window_bounds = array<i64: 1, 1, 128>}]} {
    %c0 = arith.constant 0 : index
    %c0_0 = arith.constant 0 : index
    %c0_1 = arith.constant 0 : index
    %0 = vector.load %arg2[%c0, %c0_0, %c0_1] : memref<1x3x128xf32, #tpu.memory_space<vmem>>, vector<1x3x128xf32>
    %1 = vector.shape_cast %0 : vector<1x3x128xf32> to vector<3x128xf32>
    %2 = arith.truncf %1 : vector<3x128xf32> to vector<3x128xbf16>
    %c0_2 = arith.constant 0 : index
    %c0_3 = arith.constant 0 : index
    %c0_4 = arith.constant 0 : index
    %3 = vector.load %arg3[%c0_2, %c0_3, %c0_4] : memref<1x128x1xf32, #tpu.memory_space<vmem>>, vector<1x128x1xf32>
    %4 = vector.shape_cast %3 : vector<1x128x1xf32> to vector<128x1xf32>
    %c0_5 = arith.constant 0 : index
    %c0_6 = arith.constant 0 : index
    %5 = vector.load %arg4[%c0_5, %c0_6] : memref<128x3xbf16, #tpu.memory_space<vmem>>, vector<128x3xbf16>
    %cst = arith.constant dense<0.000000e+00> : vector<128x128xf32>
    %6 = tpu.matmul %5, %2, %cst {dimension_numbers = #tpu.dot_dimension_numbers<[1], [0], [0], [1], [0, 0, 1, 1], [], []>} : vector<128x3xbf16>, vector<3x128xbf16>, vector<128x128xf32> -> vector<128x128xf32>
    %7 = vector.broadcast %4 : vector<128x1xf32> to vector<128x128xf32>
    %8 = arith.addf %6, %7 : vector<128x128xf32>
    %cst_7 = arith.constant 2.000000e-02 : f32
    %9 = vector.broadcast %cst_7 : f32 to vector<128x128xf32>
    %10 = arith.mulf %9, %8 : vector<128x128xf32>
    %11 = arith.maximumf %8, %10 : vector<128x128xf32>
    %c0_8 = arith.constant 0 : index
    %c0_9 = arith.constant 0 : index
    %12 = vector.load %arg10[%c0_8, %c0_9] : memref<128x5xf32, #tpu.memory_space<vmem>>, vector<128x5xf32>
    %c0_10 = arith.constant 0 : index
    %c0_11 = arith.constant 0 : index
    %13 = vector.load %arg5[%c0_10, %c0_11] : memref<128x128xbf16, #tpu.memory_space<vmem>>, vector<128x128xbf16>
    %14 = vector.extract_strided_slice %12 {offsets = [0, 0], sizes = [128, 1], strides = [1, 1]} : vector<128x5xf32> to vector<128x1xf32>
    %15 = arith.truncf %11 : vector<128x128xf32> to vector<128x128xbf16>
    %cst_12 = arith.constant dense<0.000000e+00> : vector<128x128xf32>
    %16 = tpu.matmul %13, %15, %cst_12 {dimension_numbers = #tpu.dot_dimension_numbers<[1], [0], [0], [1], [0, 0, 1, 1], [], []>} : vector<128x128xbf16>, vector<128x128xbf16>, vector<128x128xf32> -> vector<128x128xf32>
    %17 = vector.broadcast %14 : vector<128x1xf32> to vector<128x128xf32>
    %18 = arith.addf %16, %17 : vector<128x128xf32>
    %cst_13 = arith.constant 2.000000e-02 : f32
    %19 = vector.broadcast %cst_13 : f32 to vector<128x128xf32>
    %20 = arith.mulf %19, %18 : vector<128x128xf32>
    %21 = arith.maximumf %18, %20 : vector<128x128xf32>
    %c0_14 = arith.constant 0 : index
    %c0_15 = arith.constant 0 : index
    %22 = vector.load %arg6[%c0_14, %c0_15] : memref<128x128xbf16, #tpu.memory_space<vmem>>, vector<128x128xbf16>
    %23 = vector.extract_strided_slice %12 {offsets = [0, 1], sizes = [128, 1], strides = [1, 1]} : vector<128x5xf32> to vector<128x1xf32>
    %24 = arith.truncf %21 : vector<128x128xf32> to vector<128x128xbf16>
    %cst_16 = arith.constant dense<0.000000e+00> : vector<128x128xf32>
    %25 = tpu.matmul %22, %24, %cst_16 {dimension_numbers = #tpu.dot_dimension_numbers<[1], [0], [0], [1], [0, 0, 1, 1], [], []>} : vector<128x128xbf16>, vector<128x128xbf16>, vector<128x128xf32> -> vector<128x128xf32>
    %26 = vector.broadcast %23 : vector<128x1xf32> to vector<128x128xf32>
    %27 = arith.addf %25, %26 : vector<128x128xf32>
    %cst_17 = arith.constant 2.000000e-02 : f32
    %28 = vector.broadcast %cst_17 : f32 to vector<128x128xf32>
    %29 = arith.mulf %28, %27 : vector<128x128xf32>
    %30 = arith.maximumf %27, %29 : vector<128x128xf32>
    %c0_18 = arith.constant 0 : index
    %c0_19 = arith.constant 0 : index
    %31 = vector.load %arg7[%c0_18, %c0_19] : memref<64x128xbf16, #tpu.memory_space<vmem>>, vector<64x128xbf16>
    %32 = vector.extract_strided_slice %12 {offsets = [0, 2], sizes = [64, 1], strides = [1, 1]} : vector<128x5xf32> to vector<64x1xf32>
    %33 = arith.truncf %30 : vector<128x128xf32> to vector<128x128xbf16>
    %cst_20 = arith.constant dense<0.000000e+00> : vector<64x128xf32>
    %34 = tpu.matmul %31, %33, %cst_20 {dimension_numbers = #tpu.dot_dimension_numbers<[1], [0], [0], [1], [0, 0, 1, 1], [], []>} : vector<64x128xbf16>, vector<128x128xbf16>, vector<64x128xf32> -> vector<64x128xf32>
    %35 = vector.broadcast %32 : vector<64x1xf32> to vector<64x128xf32>
    %36 = arith.addf %34, %35 : vector<64x128xf32>
    %cst_21 = arith.constant 2.000000e-02 : f32
    %37 = vector.broadcast %cst_21 : f32 to vector<64x128xf32>
    %38 = arith.mulf %37, %36 : vector<64x128xf32>
    %39 = arith.maximumf %36, %38 : vector<64x128xf32>
    %c0_22 = arith.constant 0 : index
    %c0_23 = arith.constant 0 : index
    %40 = vector.load %arg8[%c0_22, %c0_23] : memref<32x64xbf16, #tpu.memory_space<vmem>>, vector<32x64xbf16>
    %41 = vector.extract_strided_slice %12 {offsets = [0, 3], sizes = [32, 1], strides = [1, 1]} : vector<128x5xf32> to vector<32x1xf32>
    %42 = arith.truncf %39 : vector<64x128xf32> to vector<64x128xbf16>
    %cst_24 = arith.constant dense<0.000000e+00> : vector<32x128xf32>
    %43 = tpu.matmul %40, %42, %cst_24 {dimension_numbers = #tpu.dot_dimension_numbers<[1], [0], [0], [1], [0, 0, 1, 1], [], []>} : vector<32x64xbf16>, vector<64x128xbf16>, vector<32x128xf32> -> vector<32x128xf32>
    %44 = vector.broadcast %41 : vector<32x1xf32> to vector<32x128xf32>
    %45 = arith.addf %43, %44 : vector<32x128xf32>
    %cst_25 = arith.constant 2.000000e-02 : f32
    %46 = vector.broadcast %cst_25 : f32 to vector<32x128xf32>
    %47 = arith.mulf %46, %45 : vector<32x128xf32>
    %48 = arith.maximumf %45, %47 : vector<32x128xf32>
    %c0_26 = arith.constant 0 : index
    %c0_27 = arith.constant 0 : index
    %49 = vector.load %arg9[%c0_26, %c0_27] : memref<16x32xbf16, #tpu.memory_space<vmem>>, vector<16x32xbf16>
    %50 = vector.extract_strided_slice %12 {offsets = [0, 4], sizes = [16, 1], strides = [1, 1]} : vector<128x5xf32> to vector<16x1xf32>
    %51 = arith.truncf %48 : vector<32x128xf32> to vector<32x128xbf16>
    %cst_28 = arith.constant dense<0.000000e+00> : vector<16x128xf32>
    %52 = tpu.matmul %49, %51, %cst_28 {dimension_numbers = #tpu.dot_dimension_numbers<[1], [0], [0], [1], [0, 0, 1, 1], [], []>} : vector<16x32xbf16>, vector<32x128xbf16>, vector<16x128xf32> -> vector<16x128xf32>
    %53 = vector.broadcast %50 : vector<16x1xf32> to vector<16x128xf32>
    %54 = arith.addf %52, %53 : vector<16x128xf32>
    %cst_29 = arith.constant 2.000000e-02 : f32
    %55 = vector.broadcast %cst_29 : f32 to vector<16x128xf32>
    %56 = arith.mulf %55, %54 : vector<16x128xf32>
    %57 = arith.maximumf %54, %56 : vector<16x128xf32>
    %c0_30 = arith.constant 0 : index
    %c0_31 = arith.constant 0 : index
    %58 = vector.load %arg11[%c0_30, %c0_31] : memref<16x1xf32, #tpu.memory_space<vmem>>, vector<16x1xf32>
    %59 = vector.broadcast %58 : vector<16x1xf32> to vector<16x128xf32>
    %60 = arith.mulf %57, %59 : vector<16x128xf32>
    %cst_32 = arith.constant dense<0.000000e+00> : vector<128xf32>
    %61 = vector.multi_reduction <add>, %60, %cst_32 [0] : vector<16x128xf32> to vector<128xf32>
    %62 = vector.shape_cast %61 : vector<128xf32> to vector<1x128xf32>
    %c0_33 = arith.constant 0 : index
    %c0_34 = arith.constant 0 : index
    %63 = vector.load %arg12[%c0_33, %c0_34] : memref<1x1xf32, #tpu.memory_space<vmem>>, vector<1x1xf32>
    %64 = vector.broadcast %63 : vector<1x1xf32> to vector<1x128xf32>
    %65 = arith.addf %62, %64 : vector<1x128xf32>
    %cst_35 = arith.constant 0.00999999977 : f32
    %66 = vector.broadcast %cst_35 : f32 to vector<1x128xf32>
    %67 = arith.mulf %65, %66 : vector<1x128xf32>
    %cst_36 = arith.constant 9.900000e-01 : f32
    %68 = vector.broadcast %cst_36 : f32 to vector<1x128xf32>
    %69 = arith.addf %67, %68 : vector<1x128xf32>
    %70 = arith.minimumf %65, %69 : vector<1x128xf32>
    %cst_37 = arith.constant 0.00999999977 : f32
    %71 = vector.broadcast %cst_37 : f32 to vector<1x128xf32>
    %72 = arith.mulf %65, %71 : vector<1x128xf32>
    %73 = arith.maximumf %70, %72 : vector<1x128xf32>
    %c0_38 = arith.constant 0 : index
    %c0_39 = arith.constant 0 : index
    %c0_40 = arith.constant 0 : index
    %74 = vector.load %arg13[%c0_38, %c0_39, %c0_40] : memref<1x1x128xf32, #tpu.memory_space<vmem>>, vector<1x1x128xf32>
    %75 = vector.shape_cast %74 : vector<1x1x128xf32> to vector<1x128xf32>
    %76 = vector.shape_cast %73 : vector<1x128xf32> to vector<1x1x128xf32>
    tpu.vector_store %arg13[%c0_38, %c0_39, %c0_40], %76 {strides = array<i32>} : memref<1x1x128xf32, #tpu.memory_space<vmem>>, vector<1x1x128xf32>,
    return
  }
  func.func @transform_0(%arg0: i32, %arg1: i32) -> (i32, i32, i32) {
    %c0_i32 = arith.constant 0 : i32
    %c0_i32_0 = arith.constant 0 : i32
    return %arg0, %c0_i32, %arg1 : i32, i32, i32
  }
  func.func @transform_1(%arg0: i32, %arg1: i32) -> (i32, i32, i32) {
    %c0_i32 = arith.constant 0 : i32
    %c0_i32_0 = arith.constant 0 : i32
    %c0_i32_1 = arith.constant 0 : i32
    return %arg0, %c0_i32, %c0_i32_0 : i32, i32, i32
  }
  func.func @transform_2(%arg0: i32, %arg1: i32) -> (i32, i32) {
    %c0_i32 = arith.constant 0 : i32
    %c0_i32_0 = arith.constant 0 : i32
    %c0_i32_1 = arith.constant 0 : i32
    return %c0_i32, %c0_i32_0 : i32, i32
  }
  func.func @transform_3(%arg0: i32, %arg1: i32) -> (i32, i32) {
    %c0_i32 = arith.constant 0 : i32
    %c0_i32_0 = arith.constant 0 : i32
    %c0_i32_1 = arith.constant 0 : i32
    return %c0_i32, %c0_i32_0 : i32, i32
  }
  func.func @transform_4(%arg0: i32, %arg1: i32) -> (i32, i32) {
    %c0_i32 = arith.constant 0 : i32
    %c0_i32_0 = arith.constant 0 : i32
    %c0_i32_1 = arith.constant 0 : i32
    return %c0_i32, %c0_i32_0 : i32, i32
  }
  func.func @transform_5(%arg0: i32, %arg1: i32) -> (i32, i32) {
    %c0_i32 = arith.constant 0 : i32
    %c0_i32_0 = arith.constant 0 : i32
    %c0_i32_1 = arith.constant 0 : i32
    return %c0_i32, %c0_i32_0 : i32, i32
  }
  func.func @transform_6(%arg0: i32, %arg1: i32) -> (i32, i32) {
    %c0_i32 = arith.constant 0 : i32
    %c0_i32_0 = arith.constant 0 : i32
    %c0_i32_1 = arith.constant 0 : i32
    return %c0_i32, %c0_i32_0 : i32, i32
  }
  func.func @transform_7(%arg0: i32, %arg1: i32) -> (i32, i32) {
    %c0_i32 = arith.constant 0 : i32
    %c0_i32_0 = arith.constant 0 : i32
    %c0_i32_1 = arith.constant 0 : i32
    return %c0_i32, %c0_i32_0 : i32, i32
  }
  func.func @transform_8(%arg0: i32, %arg1: i32) -> (i32, i32) {
    %c0_i32 = arith.constant 0 : i32
    %c0_i32_0 = arith.constant 0 : i32
    %c0_i32_1 = arith.constant 0 : i32
    return %c0_i32, %c0_i32_0 : i32, i32
  }
  func.func @transform_9(%arg0: i32, %arg1: i32) -> (i32, i32) {
    %c0_i32 = arith.constant 0 : i32
    %c0_i32_0 = arith.constant 0 : i32
    %c0_i32_1 = arith.constant 0 : i32
    return %c0_i32, %c0_i32_0 : i32, i32
  }
  func.func @transform_10(%arg0: i32, %arg1: i32) -> (i32, i32) {
    %c0_i32 = arith.constant 0 : i32
    %c0_i32_0 = arith.constant 0 : i32
    %c0_i32_1 = arith.constant 0 : i32
    return %c0_i32, %c0_i32_0 : i32, i32
  }
  func.func @transform_11(%arg0: i32, %arg1: i32) -> (i32, i32, i32) {
    %c0_i32 = arith.constant 0 : i32
    %c0_i32_0 = arith.constant 0 : i32
    return %arg0, %c0_i32, %arg1 : i32, i32, i32
  }
}

</mosaic_0001>

<llo_original>
// kernel: generator_forward.1
$region0: #{generator_forward.1}
  #allocation0 [shape = 'u32[]', space=smem, size = 0x4, offset = 0x4, fixed_abs, tag = 'smem constant byte address 0x4 - core index']
  #allocation1 [shape = 'u32[144,128]{1,0:T(1,128)}', space=vmem, size = 0x12000, scoped, tag = 'internal scratch']
  #allocation2 [shape = 'f32[1,1]{1,0:T(1,128)S(1)}', space=vmem, size = 0x200, scoped, tag = 'scoped memory for generator_forward.1']
  %s0 = inlined_call_operand.vmem [shape: f32[2,3,256], index: 0, kind: input, shape index: {}]
  %s1 = inlined_call_operand.vmem [shape: f32[2,128,1], index: 1, kind: input, shape index: {}]
  %s2 = inlined_call_operand.vmem [shape: bf16[128,3], index: 2, kind: input, shape index: {}]
  %s3 = inlined_call_operand.vmem [shape: bf16[128,128], index: 3, kind: input, shape index: {}]
  %s4 = inlined_call_operand.vmem [shape: bf16[128,128], index: 4, kind: input, shape index: {}]
  %s5 = inlined_call_operand.vmem [shape: bf16[64,128], index: 5, kind: input, shape index: {}]
  %s6 = inlined_call_operand.vmem [shape: bf16[32,64], index: 6, kind: input, shape index: {}]
  %s7 = inlined_call_operand.vmem [shape: bf16[16,32], index: 7, kind: input, shape index: {}]
  %s8 = inlined_call_operand.vmem [shape: f32[128,5], index: 8, kind: input, shape index: {}]
  %s9 = inlined_call_operand.vmem [shape: f32[16,1], index: 9, kind: input, shape index: {}]
  %s10 = inlined_call_operand.<no memory space> [shape: f32[1,1], index: 10, kind: input, shape index: {}]
  %s11 = inlined_call_operand.vmem [shape: f32[2,1,256], index: 11, kind: output, shape index: {}]
  %s12 = sld [smem:[#allocation0]]
  $region77: #{generator_forward.1} parent=0
    _
  %s14 = ssub.s32 1, %s12
  %s15 = scalar_select 0, %s14, %s12
  %v16 = vstv %s10
  %17 = vst [vmem:[#allocation2] sm:$0x1] %v16
  loop: start=0, step=1, limit=6
  $region2: #{generator_forward.1} parent=0 // loop_pre_header
    _
  $region3: #{generator_forward.1} parent=0 // loop_header
    %s19 = sphi 0, %s23
    %p20 = scmp.ge.s32.totalorder %s19, 6
    %s26 = sphi 0, %s38
    %s27 = sphi 0, %s34
    %s28 = sphi 0, %s26
    %s29 = sphi 0, %s27
    %s30 = sphi 0, %s28
    %s31 = sphi 0, %s29
    %s43 = sphi 0, %s45
    %s46 = sphi 0, %s43
    %s47 = sphi 0, %s46
    %s63 = sphi 0, %s47
    %s69 = sphi 0, %s71
    %s72 = sphi 0, %s69
    %s73 = sphi 0, %s72
    %s89 = sphi 0, %s73
    %s93 = sphi 0, %s93
    %s95 = sphi 0, %s93
    %s96 = sphi 0, %s95
    %s110 = sphi 0, %s96
    %s114 = sphi 0, %s114
    %s116 = sphi 0, %s114
    %s117 = sphi 0, %s116
    %s131 = sphi 0, %s117
    %s135 = sphi 0, %s135
    %s137 = sphi 0, %s135
    %s138 = sphi 0, %s137
    %s152 = sphi 0, %s138
    %s156 = sphi 0, %s156
    %s158 = sphi 0, %s156
    %s159 = sphi 0, %s158
    %s173 = sphi 0, %s159
    %s177 = sphi 0, %s177
    %s179 = sphi 0, %s177
    %s180 = sphi 0, %s179
    %s194 = sphi 0, %s180
    %s198 = sphi 0, %s198
    %s200 = sphi 0, %s198
    %s201 = sphi 0, %s200
    %s215 = sphi 0, %s201
    %s219 = sphi 0, %s219
    %s221 = sphi 0, %s219
    %s222 = sphi 0, %s221
    %s236 = sphi 0, %s222
    %s240 = sphi 0, %s240
    %s242 = sphi 0, %s240
    %s243 = sphi 0, %s242
    %s257 = sphi 0, %s243
    %s261 = sphi 0, %s261
    %s263 = sphi 0, %s261
    %s264 = sphi 0, %s263
    %s278 = sphi 0, %s264
    %s286 = sphi 0, %s288
    %s289 = sphi 0, %s286
    %s290 = sphi 0, %s289
    %s306 = sphi 0, %s290
  $region4: #{generator_forward.1} parent=0 // loop_header_branch
    %22 = sbr.rel (%p20) target = $region8
  $region5: #{generator_forward.1} parent=0 // loop_body
    %s24 = ssub.s32 %s19, 1
    %s25 = ssub.s32 %s19, 2
    %s32 = sadd.s32 1, %s27
    %p33 = scmp.ge.s32.totalorder %s32, 2
    %s34 = scalar_select %p33, 0, %s32
    %s35 = sadd.s32 1, %s26
    %s36 = scalar_select %p33, %s35, %s26
    %p37 = scmp.ge.s32.totalorder %s36, 2
    %s38 = scalar_select %p37, 0, %s36
    %s39 = ssub.s32 %s26, %s38
    %s40 = ssub.s32 %s27, %s34
    %s41 = sor.u32 %s39, %s40
    %p42 = scmp.eq.s32.totalorder %s41, 0
    %s44 = sadd.s32 %s43, 1
    %s45 = scalar_select %p42, %s43, %s44
    %p48 = pneg %p42
    %p49 = scmp.eq.s32.totalorder %s19, 3
    %p50 = por %p48, %p49
    %p51 = scmp.ne.s32.totalorder %s43, %s46
    %p52 = scmp.eq.s32.totalorder %s19, 0
    %p53 = por %p51, %p52
    %p54 = scmp.ne.s32.totalorder %s43, %s46
    %p55 = scmp.eq.s32.totalorder %s24, 3
    %p56 = por %p54, %p55
    %p57 = scmp.ne.s32.totalorder %s46, %s47
    %p58 = scmp.eq.s32.totalorder %s24, 0
    %p59 = por %p57, %p58
    %p60 = scmp.ne.s32.totalorder %s46, %s47
    %p61 = scmp.eq.s32.totalorder %s25, 3
    %p62 = por %p60, %p61
    %p64 = scmp.ne.s32.totalorder %s47, %s63
    %p65 = scmp.eq.s32.totalorder %s25, 0
    %p66 = por %p64, %p65
    %s67 = ssub.s32 %s26, %s38
    %p68 = scmp.eq.s32.totalorder %s67, 0
    %s70 = sadd.s32 %s69, 1
    %s71 = scalar_select %p68, %s69, %s70
    %p74 = pneg %p68
    %p75 = scmp.eq.s32.totalorder %s19, 3
    %p76 = por %p74, %p75
    %p77 = scmp.ne.s32.totalorder %s69, %s72
    %p78 = scmp.eq.s32.totalorder %s19, 0
    %p79 = por %p77, %p78
    %p80 = scmp.ne.s32.totalorder %s69, %s72
    %p81 = scmp.eq.s32.totalorder %s24, 3
    %p82 = por %p80, %p81
    %p83 = scmp.ne.s32.totalorder %s72, %s73
    %p84 = scmp.eq.s32.totalorder %s24, 0
    %p85 = por %p83, %p84
    %p86 = scmp.ne.s32.totalorder %s72, %s73
    %p87 = scmp.eq.s32.totalorder %s25, 3
    %p88 = por %p86, %p87
    %p90 = scmp.ne.s32.totalorder %s73, %s89
    %p91 = scmp.eq.s32.totalorder %s25, 0
    %p92 = por %p90, %p91
    %s94 = sadd.s32 %s93, 1
    %p97 = scmp.eq.s32.totalorder %s19, 3
    %p98 = scmp.ne.s32.totalorder %s93, %s95
    %p99 = scmp.eq.s32.totalorder %s19, 0
    %p100 = por %p98, %p99
    %p101 = scmp.ne.s32.totalorder %s93, %s95
    %p102 = scmp.eq.s32.totalorder %s24, 3
    %p103 = por %p101, %p102
    %p104 = scmp.ne.s32.totalorder %s95, %s96
    %p105 = scmp.eq.s32.totalorder %s24, 0
    %p106 = por %p104, %p105
    %p107 = scmp.ne.s32.totalorder %s95, %s96
    %p108 = scmp.eq.s32.totalorder %s25, 3
    %p109 = por %p107, %p108
    %p111 = scmp.ne.s32.totalorder %s96, %s110
    %p112 = scmp.eq.s32.totalorder %s25, 0
    %p113 = por %p111, %p112
    %s115 = sadd.s32 %s114, 1
    %p118 = scmp.eq.s32.totalorder %s19, 3
    %p119 = scmp.ne.s32.totalorder %s114, %s116
    %p120 = scmp.eq.s32.totalorder %s19, 0
    %p121 = por %p119, %p120
    %p122 = scmp.ne.s32.totalorder %s114, %s116
    %p123 = scmp.eq.s32.totalorder %s24, 3
    %p124 = por %p122, %p123
    %p125 = scmp.ne.s32.totalorder %s116, %s117
    %p126 = scmp.eq.s32.totalorder %s24, 0
    %p127 = por %p125, %p126
    %p128 = scmp.ne.s32.totalorder %s116, %s117
    %p129 = scmp.eq.s32.totalorder %s25, 3
    %p130 = por %p128, %p129
    %p132 = scmp.ne.s32.totalorder %s117, %s131
    %p133 = scmp.eq.s32.totalorder %s25, 0
    %p134 = por %p132, %p133
    %s136 = sadd.s32 %s135, 1
    %p139 = scmp.eq.s32.totalorder %s19, 3
    %p140 = scmp.ne.s32.totalorder %s135, %s137
    %p141 = scmp.eq.s32.totalorder %s19, 0
    %p142 = por %p140, %p141
    %p143 = scmp.ne.s32.totalorder %s135, %s137
    %p144 = scmp.eq.s32.totalorder %s24, 3
    %p145 = por %p143, %p144
    %p146 = scmp.ne.s32.totalorder %s137, %s138
    %p147 = scmp.eq.s32.totalorder %s24, 0
    %p148 = por %p146, %p147
    %p149 = scmp.ne.s32.totalorder %s137, %s138
    %p150 = scmp.eq.s32.totalorder %s25, 3
    %p151 = por %p149, %p150
    %p153 = scmp.ne.s32.totalorder %s138, %s152
    %p154 = scmp.eq.s32.totalorder %s25, 0
    %p155 = por %p153, %p154
    %s157 = sadd.s32 %s156, 1
    %p160 = scmp.eq.s32.totalorder %s19, 3
    %p161 = scmp.ne.s32.totalorder %s156, %s158
    %p162 = scmp.eq.s32.totalorder %s19, 0
    %p163 = por %p161, %p162
    %p164 = scmp.ne.s32.totalorder %s156, %s158
    %p165 = scmp.eq.s32.totalorder %s24, 3
    %p166 = por %p164, %p165
    %p167 = scmp.ne.s32.totalorder %s158, %s159
    %p168 = scmp.eq.s32.totalorder %s24, 0
    %p169 = por %p167, %p168
    %p170 = scmp.ne.s32.totalorder %s158, %s159
    %p171 = scmp.eq.s32.totalorder %s25, 3
    %p172 = por %p170, %p171
    %p174 = scmp.ne.s32.totalorder %s159, %s173
    %p175 = scmp.eq.s32.totalorder %s25, 0
    %p176 = por %p174, %p175
    %s178 = sadd.s32 %s177, 1
    %p181 = scmp.eq.s32.totalorder %s19, 3
    %p182 = scmp.ne.s32.totalorder %s177, %s179
    %p183 = scmp.eq.s32.totalorder %s19, 0
    %p184 = por %p182, %p183
    %p185 = scmp.ne.s32.totalorder %s177, %s179
    %p186 = scmp.eq.s32.totalorder %s24, 3
    %p187 = por %p185, %p186
    %p188 = scmp.ne.s32.totalorder %s179, %s180
    %p189 = scmp.eq.s32.totalorder %s24, 0
    %p190 = por %p188, %p189
    %p191 = scmp.ne.s32.totalorder %s179, %s180
    %p192 = scmp.eq.s32.totalorder %s25, 3
    %p193 = por %p191, %p192
    %p195 = scmp.ne.s32.totalorder %s180, %s194
    %p196 = scmp.eq.s32.totalorder %s25, 0
    %p197 = por %p195, %p196
    %s199 = sadd.s32 %s198, 1
    %p202 = scmp.eq.s32.totalorder %s19, 3
    %p203 = scmp.ne.s32.totalorder %s198, %s200
    %p204 = scmp.eq.s32.totalorder %s19, 0
    %p205 = por %p203, %p204
    %p206 = scmp.ne.s32.totalorder %s198, %s200
    %p207 = scmp.eq.s32.totalorder %s24, 3
    %p208 = por %p206, %p207
    %p209 = scmp.ne.s32.totalorder %s200, %s201
    %p210 = scmp.eq.s32.totalorder %s24, 0
    %p211 = por %p209, %p210
    %p212 = scmp.ne.s32.totalorder %s200, %s201
    %p213 = scmp.eq.s32.totalorder %s25, 3
    %p214 = por %p212, %p213
    %p216 = scmp.ne.s32.totalorder %s201, %s215
    %p217 = scmp.eq.s32.totalorder %s25, 0
    %p218 = por %p216, %p217
    %s220 = sadd.s32 %s219, 1
    %p223 = scmp.eq.s32.totalorder %s19, 3
    %p224 = scmp.ne.s32.totalorder %s219, %s221
    %p225 = scmp.eq.s32.totalorder %s19, 0
    %p226 = por %p224, %p225
    %p227 = scmp.ne.s32.totalorder %s219, %s221
    %p228 = scmp.eq.s32.totalorder %s24, 3
    %p229 = por %p227, %p228
    %p230 = scmp.ne.s32.totalorder %s221, %s222
    %p231 = scmp.eq.s32.totalorder %s24, 0
    %p232 = por %p230, %p231
    %p233 = scmp.ne.s32.totalorder %s221, %s222
    %p234 = scmp.eq.s32.totalorder %s25, 3
    %p235 = por %p233, %p234
    %p237 = scmp.ne.s32.totalorder %s222, %s236
    %p238 = scmp.eq.s32.totalorder %s25, 0
    %p239 = por %p237, %p238
    %s241 = sadd.s32 %s240, 1
    %p244 = scmp.eq.s32.totalorder %s19, 3
    %p245 = scmp.ne.s32.totalorder %s240, %s242
    %p246 = scmp.eq.s32.totalorder %s19, 0
    %p247 = por %p245, %p246
    %p248 = scmp.ne.s32.totalorder %s240, %s242
    %p249 = scmp.eq.s32.totalorder %s24, 3
    %p250 = por %p248, %p249
    %p251 = scmp.ne.s32.totalorder %s242, %s243
    %p252 = scmp.eq.s32.totalorder %s24, 0
    %p253 = por %p251, %p252
    %p254 = scmp.ne.s32.totalorder %s242, %s243
    %p255 = scmp.eq.s32.totalorder %s25, 3
    %p256 = por %p254, %p255
    %p258 = scmp.ne.s32.totalorder %s243, %s257
    %p259 = scmp.eq.s32.totalorder %s25, 0
    %p260 = por %p258, %p259
    %s262 = sadd.s32 %s261, 1
    %p265 = scmp.eq.s32.totalorder %s19, 3
    %p266 = scmp.ne.s32.totalorder %s261, %s263
    %p267 = scmp.eq.s32.totalorder %s19, 0
    %p268 = por %p266, %p267
    %p269 = scmp.ne.s32.totalorder %s261, %s263
    %p270 = scmp.eq.s32.totalorder %s24, 3
    %p271 = por %p269, %p270
    %p272 = scmp.ne.s32.totalorder %s263, %s264
    %p273 = scmp.eq.s32.totalorder %s24, 0
    %p274 = por %p272, %p273
    %p275 = scmp.ne.s32.totalorder %s263, %s264
    %p276 = scmp.eq.s32.totalorder %s25, 3
    %p277 = por %p275, %p276
    %p279 = scmp.ne.s32.totalorder %s264, %s278
    %p280 = scmp.eq.s32.totalorder %s25, 0
    %p281 = por %p279, %p280
    %s282 = ssub.s32 %s26, %s38
    %s283 = ssub.s32 %s27, %s34
    %s284 = sor.u32 %s282, %s283
    %p285 = scmp.eq.s32.totalorder %s284, 0
    %s287 = sadd.s32 %s286, 1
    %s288 = scalar_select %p285, %s286, %s287
    %p291 = pneg %p285
    %p292 = scmp.eq.s32.totalorder %s19, 3
    %p293 = por %p291, %p292
    %p294 = scmp.ne.s32.totalorder %s286, %s289
    %p295 = scmp.eq.s32.totalorder %s19, 0
    %p296 = por %p294, %p295
    %p297 = scmp.ne.s32.totalorder %s286, %s289
    %p298 = scmp.eq.s32.totalorder %s24, 3
    %p299 = por %p297, %p298
    %p300 = scmp.ne.s32.totalorder %s289, %s290
    %p301 = scmp.eq.s32.totalorder %s24, 0
    %p302 = por %p300, %p301
    %p303 = scmp.ne.s32.totalorder %s289, %s290
    %p304 = scmp.eq.s32.totalorder %s25, 3
    %p305 = por %p303, %p304
    %p307 = scmp.ne.s32.totalorder %s290, %s306
    %p308 = scmp.eq.s32.totalorder %s25, 0
    %p309 = por %p307, %p308
    %p310 = scmp.le.s32.totalorder 1, %s19
    %p311 = scmp.lt.s32.totalorder %s19, 5
    %p312 = pnand %p310, %p311
    %p313 = pneg %p312
    // Predicated region
    $region9: #{generator_forward.1} parent=5 // pred_check
      _
    $region10: #{generator_forward.1} parent=5 // pred_check_branch
      %315 = sbr.rel (%p312) target = $region12
    $region11: #{generator_forward.1} parent=5 // pred_region
      %s316 = ssub.s32 %s19, 1
      // Predicated region
      $region13: #{generator_forward.1} parent=11 // pred_check
        %p317 = pneg %p106
      $region14: #{generator_forward.1} parent=11 // pred_check_branch
        %319 = sbr.rel (%p317) target = $region16
      $region15: #{generator_forward.1} parent=11 // pred_region
        _
      $region16: #{generator_forward.1} parent=11 // pred_fallthru
        _
      // Predicated region
      $region17: #{generator_forward.1} parent=11 // pred_check
        %p320 = pneg %p127
      $region18: #{generator_forward.1} parent=11 // pred_check_branch
        %322 = sbr.rel (%p320) target = $region20
      $region19: #{generator_forward.1} parent=11 // pred_region
        _
      $region20: #{generator_forward.1} parent=11 // pred_fallthru
        _
      // Predicated region
      $region21: #{generator_forward.1} parent=11 // pred_check
        %p323 = pneg %p148
      $region22: #{generator_forward.1} parent=11 // pred_check_branch
        %325 = sbr.rel (%p323) target = $region24
      $region23: #{generator_forward.1} parent=11 // pred_region
        _
      $region24: #{generator_forward.1} parent=11 // pred_fallthru
        _
      // Predicated region
      $region25: #{generator_forward.1} parent=11 // pred_check
        %p326 = pneg %p169
      $region26: #{generator_forward.1} parent=11 // pred_check_branch
        %328 = sbr.rel (%p326) target = $region28
      $region27: #{generator_forward.1} parent=11 // pred_region
        _
      $region28: #{generator_forward.1} parent=11 // pred_fallthru
        _
      // Predicated region
      $region29: #{generator_forward.1} parent=11 // pred_check
        %p329 = pneg %p190
      $region30: #{generator_forward.1} parent=11 // pred_check_branch
        %331 = sbr.rel (%p329) target = $region32
      $region31: #{generator_forward.1} parent=11 // pred_region
        _
      $region32: #{generator_forward.1} parent=11 // pred_fallthru
        _
      // Predicated region
      $region33: #{generator_forward.1} parent=11 // pred_check
        %p332 = pneg %p211
      $region34: #{generator_forward.1} parent=11 // pred_check_branch
        %334 = sbr.rel (%p332) target = $region36
      $region35: #{generator_forward.1} parent=11 // pred_region
        _
      $region36: #{generator_forward.1} parent=11 // pred_fallthru
        _
      // Predicated region
      $region37: #{generator_forward.1} parent=11 // pred_check
        %p335 = pneg %p232
      $region38: #{generator_forward.1} parent=11 // pred_check_branch
        %337 = sbr.rel (%p335) target = $region40
      $region39: #{generator_forward.1} parent=11 // pred_region
        _
      $region40: #{generator_forward.1} parent=11 // pred_fallthru
        _
      // Predicated region
      $region41: #{generator_forward.1} parent=11 // pred_check
        %p338 = pneg %p253
      $region42: #{generator_forward.1} parent=11 // pred_check_branch
        %340 = sbr.rel (%p338) target = $region44
      $region43: #{generator_forward.1} parent=11 // pred_region
        _
      $region44: #{generator_forward.1} parent=11 // pred_fallthru
        _
      // Predicated region
      $region45: #{generator_forward.1} parent=11 // pred_check
        %p341 = pneg %p274
      $region46: #{generator_forward.1} parent=11 // pred_check_branch
        %343 = sbr.rel (%p341) target = $region48
      $region47: #{generator_forward.1} parent=11 // pred_region
        _
      $region48: #{generator_forward.1} parent=11 // pred_fallthru
        _
    $region12: #{generator_forward.1} parent=5 // pred_fallthru
      _
    %p344 = scmp.lt.s32.totalorder %s19, 4
    // Predicated region
    $region49: #{generator_forward.1} parent=5 // pred_check
      %p345 = pneg %p344
    $region50: #{generator_forward.1} parent=5 // pred_check_branch
      %347 = sbr.rel (%p345) target = $region52
    $region51: #{generator_forward.1} parent=5 // pred_region
      // Predicated region
      $region53: #{generator_forward.1} parent=51 // pred_check
        %p348 = pneg %p53
      $region54: #{generator_forward.1} parent=51 // pred_check_branch
        %350 = sbr.rel (%p348) target = $region56
      $region55: #{generator_forward.1} parent=51 // pred_region
        %p351 = scmp.lt.s32.totalorder %s26, 1
        %s352 = scalar_select %p351, %s26, 1
        %p353 = scmp.lt.s32.totalorder %s27, 1
        %s354 = scalar_select %p353, %s27, 1
        %s355 = smul.addr %s352, 2
        %s356 = sadd.s32 %s354, %s355
        %s357 = smul.addr %s356, 4
        %s358 = scalar_lea.vmem %s0, %s357
      $region56: #{generator_forward.1} parent=51 // pred_fallthru
        _
      // Predicated region
      $region57: #{generator_forward.1} parent=51 // pred_check
        %p359 = pneg %p79
      $region58: #{generator_forward.1} parent=51 // pred_check_branch
        %361 = sbr.rel (%p359) target = $region60
      $region59: #{generator_forward.1} parent=51 // pred_region
        %p362 = scmp.lt.s32.totalorder %s26, 1
        %s363 = scalar_select %p362, %s26, 1
        %s364 = smul.addr %s363, 16
        %s365 = smul.addr %s364, 8
        %s366 = scalar_lea.vmem %s1, %s365
      $region60: #{generator_forward.1} parent=51 // pred_fallthru
        _
    $region52: #{generator_forward.1} parent=5 // pred_fallthru
      _
    %p367 = scmp.le.s32.totalorder 1, %s19
    %p368 = scmp.lt.s32.totalorder %s19, 5
    %p369 = pnand %p367, %p368
    %p370 = pneg %p369
    // Predicated region
    $region61: #{generator_forward.1} parent=5 // pred_check
      _
    $region62: #{generator_forward.1} parent=5 // pred_check_branch
      %372 = sbr.rel (%p369) target = $region64
    $region63: #{generator_forward.1} parent=5 // pred_region
      %s373 = ssub.s32 %s19, 1
      %p374 = scmp.lt.s32.totalorder %s28, 1
      %s375 = scalar_select %p374, %s28, 1
      %p376 = scmp.lt.s32.totalorder %s29, 1
      %s377 = scalar_select %p376, %s29, 1
      %s378 = smul.addr %s375, 2
      %s379 = sadd.s32 %s377, %s378
      %s380 = smul.addr %s379, 4
      %s381 = scalar_lea.vmem %s0, %s380
      %p382 = pneg %p59
      %p383 = pneg %p56
      %p384 = scmp.lt.s32.totalorder %s28, 1
      %s385 = scalar_select %p384, %s28, 1
      %s386 = smul.addr %s385, 16
      %s387 = smul.addr %s386, 8
      %s388 = scalar_lea.vmem %s1, %s387
      %p389 = pneg %p85
      %p390 = pneg %p82
      %p391 = pneg %p106
      %p392 = pneg %p103
      %p393 = pneg %p127
      %p394 = pneg %p124
      %p395 = pneg %p148
      %p396 = pneg %p145
      %p397 = pneg %p169
      %p398 = pneg %p166
      %p399 = pneg %p190
      %p400 = pneg %p187
      %p401 = pneg %p211
      %p402 = pneg %p208
      %p403 = pneg %p232
      %p404 = pneg %p229
      %p405 = pneg %p253
      %p406 = pneg %p250
      %p407 = pneg %p274
      %p408 = pneg %p271
      %p409 = pneg %p302
      %p410 = pneg %p299
      %p411 = scmp.lt.s32.totalorder %s28, 1
      %s412 = scalar_select %p411, %s28, 1
      %p413 = scmp.lt.s32.totalorder %s29, 1
      %s414 = scalar_select %p413, %s29, 1
      %s415 = smul.addr %s412, 2
      %s416 = sadd.s32 %s414, %s415
      %s417 = scalar_lea.vmem %s11, %s416
      %p418 = scmp.lt.s32.totalorder %s28, 1
      %s419 = scalar_select %p418, %s28, 1
      %p420 = scmp.lt.s32.totalorder %s29, 1
      %s421 = scalar_select %p420, %s29, 1
      %s422 = smul.addr %s419, 2
      %s423 = sadd.s32 %s421, %s422
      %s424 = smul.addr %s423, 4
      %s425 = scalar_lea.vmem %s0, %s424
      %p426 = scmp.lt.s32.totalorder %s28, 1
      %s427 = scalar_select %p426, %s28, 1
      %s428 = smul.addr %s427, 16
      %s429 = smul.addr %s428, 8
      %s430 = scalar_lea.vmem %s1, %s429
      %p431 = scmp.lt.s32.totalorder %s28, 1
      %s432 = scalar_select %p431, %s28, 1
      %p433 = scmp.lt.s32.totalorder %s29, 1
      %s434 = scalar_select %p433, %s29, 1
      %s435 = smul.addr %s432, 2
      %s436 = sadd.s32 %s434, %s435
      %s437 = scalar_lea.vmem %s11, %s436
      %v439 = vld [vmem:[%s425] sm:$0x7]
      %v440 = vpack.c.bf16 %v439, %v439
      %v441 = vld [vmem:[%s430] sm:$0xff]
      %v442 = vld [vmem:[%s430 + $0x8] sm:$0xff]
      %v443 = vld [vmem:[%s430 + $0x10] sm:$0xff]
      %v444 = vld [vmem:[%s430 + $0x18] sm:$0xff]
      %v445 = vld [vmem:[%s430 + $0x20] sm:$0xff]
      %v446 = vld [vmem:[%s430 + $0x28] sm:$0xff]
      %v447 = vld [vmem:[%s430 + $0x30] sm:$0xff]
      %v448 = vld [vmem:[%s430 + $0x38] sm:$0xff]
      %v449 = vld [vmem:[%s430 + $0x40] sm:$0xff]
      %v450 = vld [vmem:[%s430 + $0x48] sm:$0xff]
      %v451 = vld [vmem:[%s430 + $0x50] sm:$0xff]
      %v452 = vld [vmem:[%s430 + $0x58] sm:$0xff]
      %v453 = vld [vmem:[%s430 + $0x60] sm:$0xff]
      %v454 = vld [vmem:[%s430 + $0x68] sm:$0xff]
      %v455 = vld [vmem:[%s430 + $0x70] sm:$0xff]
      %v456 = vld [vmem:[%s430 + $0x78] sm:$0xff]
      %v457 = vld [vmem:[%s2] sm:$0xf]
      %v458 = vld [vmem:[%s2 + $0x4] sm:$0xf]
      %v459 = vld [vmem:[%s2 + $0x8] sm:$0xf]
      %v460 = vld [vmem:[%s2 + $0xc] sm:$0xf]
      %v461 = vld [vmem:[%s2 + $0x10] sm:$0xf]
      %v462 = vld [vmem:[%s2 + $0x14] sm:$0xf]
      %v463 = vld [vmem:[%s2 + $0x18] sm:$0xf]
      %v464 = vld [vmem:[%s2 + $0x1c] sm:$0xf]
      %v465 = vld [vmem:[%s2 + $0x20] sm:$0xf]
      %v466 = vld [vmem:[%s2 + $0x24] sm:$0xf]
      %v467 = vld [vmem:[%s2 + $0x28] sm:$0xf]
      %v468 = vld [vmem:[%s2 + $0x2c] sm:$0xf]
      %v469 = vld [vmem:[%s2 + $0x30] sm:$0xf]
      %v470 = vld [vmem:[%s2 + $0x34] sm:$0xf]
      %v471 = vld [vmem:[%s2 + $0x38] sm:$0xf]
      %v472 = vld [vmem:[%s2 + $0x3c] sm:$0xf]
      %474 = vset.pattern.permute.xlu0 0
      %475 = vperm.xlu0 %474, %v441
      %v476 = vpop.permute.xlu0 %475
      %479 = vset.pattern.permute.xlu0 0
      %480 = vperm.xlu0 %479, %v442
      %v481 = vpop.permute.xlu0 %480
      %484 = vset.pattern.permute.xlu0 0
      %485 = vperm.xlu0 %484, %v443
      %v486 = vpop.permute.xlu0 %485
      %489 = vset.pattern.permute.xlu0 0
      %490 = vperm.xlu0 %489, %v444
      %v491 = vpop.permute.xlu0 %490
      %494 = vset.pattern.permute.xlu0 0
      %495 = vperm.xlu0 %494, %v445
      %v496 = vpop.permute.xlu0 %495
      %499 = vset.pattern.permute.xlu0 0
      %500 = vperm.xlu0 %499, %v446
      %v501 = vpop.permute.xlu0 %500
      %504 = vset.pattern.permute.xlu0 0
      %505 = vperm.xlu0 %504, %v447
      %v506 = vpop.permute.xlu0 %505
      %509 = vset.pattern.permute.xlu0 0
      %510 = vperm.xlu0 %509, %v448
      %v511 = vpop.permute.xlu0 %510
      %514 = vset.pattern.permute.xlu0 0
      %515 = vperm.xlu0 %514, %v449
      %v516 = vpop.permute.xlu0 %515
      %519 = vset.pattern.permute.xlu0 0
      %520 = vperm.xlu0 %519, %v450
      %v521 = vpop.permute.xlu0 %520
      %524 = vset.pattern.permute.xlu0 0
      %525 = vperm.xlu0 %524, %v451
      %v526 = vpop.permute.xlu0 %525
      %529 = vset.pattern.permute.xlu0 0
      %530 = vperm.xlu0 %529, %v452
      %v531 = vpop.permute.xlu0 %530
      %534 = vset.pattern.permute.xlu0 0
      %535 = vperm.xlu0 %534, %v453
      %v536 = vpop.permute.xlu0 %535
      %539 = vset.pattern.permute.xlu0 0
      %540 = vperm.xlu0 %539, %v454
      %v541 = vpop.permute.xlu0 %540
      %544 = vset.pattern.permute.xlu0 0
      %545 = vperm.xlu0 %544, %v455
      %v546 = vpop.permute.xlu0 %545
      %549 = vset.pattern.permute.xlu0 0
      %550 = vperm.xlu0 %549, %v456
      %v551 = vpop.permute.xlu0 %550
      %v569 = vunpack.c.l.b16 %v457
      %v570 = vunpack.c.l.b16 %v458
      %v571 = vunpack.c.l.b16 %v459
      %v572 = vunpack.c.l.b16 %v460
      %v573 = vunpack.c.l.b16 %v461
      %v574 = vunpack.c.l.b16 %v462
      %v575 = vunpack.c.l.b16 %v463
      %v576 = vunpack.c.l.b16 %v464
      %v577 = vunpack.c.l.b16 %v465
      %v578 = vunpack.c.l.b16 %v466
      %v579 = vunpack.c.l.b16 %v467
      %v580 = vunpack.c.l.b16 %v468
      %v581 = vunpack.c.l.b16 %v469
      %v582 = vunpack.c.l.b16 %v470
      %v583 = vunpack.c.l.b16 %v471
      %v584 = vunpack.c.l.b16 %v472
      %v585 = vpack.c.b16 %v570, %v569
      %v586 = vpack.c.b16 %v572, %v571
      %v587 = vpack.c.b16 %v574, %v573
      %v588 = vpack.c.b16 %v576, %v575
      %v589 = vpack.c.b16 %v578, %v577
      %v590 = vpack.c.b16 %v580, %v579
      %v591 = vpack.c.b16 %v582, %v581
      %v592 = vpack.c.b16 %v584, %v583
      %vm593 = vcmask 23552
      %v595 = vsel %vm593, %v585, 0
      %v598 = vsel %vm593, %v586, 0
      %v601 = vsel %vm593, %v587, 0
      %v604 = vsel %vm593, %v588, 0
      %v607 = vsel %vm593, %v589, 0
      %v610 = vsel %vm593, %v590, 0
      %v613 = vsel %vm593, %v591, 0
      %v616 = vsel %vm593, %v592, 0
      %vm618 = vcmask 1040384
      %vm619 = vcmask 1041408
      %v620 = vsel %vm618, 4294967295, 65535
      %v621 = vsel %vm619, %v620, 0
      %v623 = vand.u32 %v440, %v621
      %625 = vmatprep.subr.bf16.mxu0 0
      %626 = vmatpush1.bf16.msra.mxu0 %v623
      %627 = vmatprep.subr.bf16.mxu0 0
      %628 = vmatpush1.bf16.msra.mxu0 0
      %629 = vmatprep.subr.bf16.mxu0 0
      %630 = vmatpush1.bf16.msra.mxu0 0
      %631 = vmatprep.subr.bf16.mxu0 0
      %632 = vmatpush1.bf16.msra.mxu0 0
      %633 = vmatprep.subr.bf16.mxu0 0
      %634 = vmatpush1.bf16.msra.mxu0 0
      %635 = vmatprep.subr.bf16.mxu0 0
      %636 = vmatpush1.bf16.msra.mxu0 0
      %637 = vmatprep.subr.bf16.mxu0 0
      %638 = vmatpush1.bf16.msra.mxu0 0
      %639 = vmatprep.subr.bf16.mxu0 0
      %640 = vmatpush1.bf16.msra.mxu0 0
      %641 = vmatprep.subr.bf16.mxu0 0
      %642 = vmatpush1.bf16.msra.mxu0 0
      %643 = vmatprep.subr.bf16.mxu0 0
      %644 = vmatpush1.bf16.msra.mxu0 0
      %645 = vmatprep.subr.bf16.mxu0 0
      %646 = vmatpush1.bf16.msra.mxu0 0
      %647 = vmatprep.subr.bf16.mxu0 0
      %648 = vmatpush1.bf16.msra.mxu0 0
      %649 = vmatprep.subr.bf16.mxu0 0
      %650 = vmatpush1.bf16.msra.mxu0 0
      %651 = vmatprep.subr.bf16.mxu0 0
      %652 = vmatpush1.bf16.msra.mxu0 0
      %653 = vmatprep.subr.bf16.mxu0 0
      %654 = vmatpush1.bf16.msra.mxu0 0
      %655 = vmatprep.subr.bf16.mxu0 0
      %656 = vmatpush1.bf16.msra.mxu0 0
      %657 = vmatprep.mubr.bf16.mxu0 0
      %658 = vmatmul.mubr.bf16.gmra.mrb[0].mxu0 %v595
      %v659 = vpop.f32.mrb[0].mxu0
      %v660 = vadd.f32 %v476, %v659
      %v661 = vpop.f32.mrb[0].mxu0
      %v662 = vpop.f32.mrb[0].mxu0
      %v663 = vadd.f32 %v481, %v662
      %v664 = vpop.f32.mrb[0].mxu0
      %665 = vmatprep.mubr.bf16.mxu0 0
      %666 = vmatmul.mubr.bf16.gmra.mrb[0].mxu0 %v598
      %v667 = vpop.f32.mrb[0].mxu0
      %v668 = vadd.f32 %v486, %v667
      %v669 = vpop.f32.mrb[0].mxu0
      %v670 = vpop.f32.mrb[0].mxu0
      %v671 = vadd.f32 %v491, %v670
      %v672 = vpop.f32.mrb[0].mxu0
      %673 = vmatprep.mubr.bf16.mxu0 0
      %674 = vmatmul.mubr.bf16.gmra.mrb[0].mxu0 %v601
      %v675 = vpop.f32.mrb[0].mxu0
      %v676 = vadd.f32 %v496, %v675
      %v677 = vpop.f32.mrb[0].mxu0
      %v678 = vpop.f32.mrb[0].mxu0
      %v679 = vadd.f32 %v501, %v678
      %v680 = vpop.f32.mrb[0].mxu0
      %681 = vmatprep.mubr.bf16.mxu0 0
      %682 = vmatmul.mubr.bf16.gmra.mrb[0].mxu0 %v604
      %v683 = vpop.f32.mrb[0].mxu0
      %v684 = vadd.f32 %v506, %v683
      %v685 = vpop.f32.mrb[0].mxu0
      %v686 = vpop.f32.mrb[0].mxu0
      %v687 = vadd.f32 %v511, %v686
      %v688 = vpop.f32.mrb[0].mxu0
      %689 = vmatprep.mubr.bf16.mxu0 0
      %690 = vmatmul.mubr.bf16.gmra.mrb[0].mxu0 %v607
      %v691 = vpop.f32.mrb[0].mxu0
      %v692 = vadd.f32 %v516, %v691
      %v693 = vpop.f32.mrb[0].mxu0
      %v694 = vpop.f32.mrb[0].mxu0
      %v695 = vadd.f32 %v521, %v694
      %v696 = vpop.f32.mrb[0].mxu0
      %697 = vmatprep.mubr.bf16.mxu0 0
      %698 = vmatmul.mubr.bf16.gmra.mrb[0].mxu0 %v610
      %v699 = vpop.f32.mrb[0].mxu0
      %v700 = vadd.f32 %v526, %v699
      %v701 = vpop.f32.mrb[0].mxu0
      %v702 = vpop.f32.mrb[0].mxu0
      %v703 = vadd.f32 %v531, %v702
      %v704 = vpop.f32.mrb[0].mxu0
      %705 = vmatprep.mubr.bf16.mxu0 0
      %706 = vmatmul.mubr.bf16.gmra.mrb[0].mxu0 %v613
      %v707 = vpop.f32.mrb[0].mxu0
      %v708 = vadd.f32 %v536, %v707
      %v709 = vpop.f32.mrb[0].mxu0
      %v710 = vpop.f32.mrb[0].mxu0
      %v711 = vadd.f32 %v541, %v710
      %v712 = vpop.f32.mrb[0].mxu0
      %713 = vmatprep.mubr.bf16.mxu0 0
      %714 = vmatmul.mubr.bf16.gmra.mrb[0].mxu0 %v616
      %v715 = vpop.f32.mrb[0].mxu0
      %v716 = vadd.f32 %v546, %v715
      %v717 = vpop.f32.mrb[0].mxu0
      %v718 = vpop.f32.mrb[0].mxu0
      %v719 = vadd.f32 %v551, %v718
      %v720 = vpop.f32.mrb[0].mxu0
      %721 = vdwg.mxu0
      %v722 = vmul.f32 %v660, 0.02
      %v723 = vmul.f32 %v663, 0.02
      %v724 = vmul.f32 %v668, 0.02
      %v725 = vmul.f32 %v671, 0.02
      %v726 = vmul.f32 %v676, 0.02
      %v727 = vmul.f32 %v679, 0.02
      %v728 = vmul.f32 %v684, 0.02
      %v729 = vmul.f32 %v687, 0.02
      %v730 = vmul.f32 %v692, 0.02
      %v731 = vmul.f32 %v695, 0.02
      %v732 = vmul.f32 %v700, 0.02
      %v733 = vmul.f32 %v703, 0.02
      %v734 = vmul.f32 %v708, 0.02
      %v735 = vmul.f32 %v711, 0.02
      %v736 = vmul.f32 %v716, 0.02
      %v737 = vmul.f32 %v719, 0.02
      %v738 = vmax.f32 %v660, %v722
      %v739 = vmax.f32 %v663, %v723
      %v740 = vmax.f32 %v668, %v724
      %v741 = vmax.f32 %v671, %v725
      %v742 = vmax.f32 %v676, %v726
      %v743 = vmax.f32 %v679, %v727
      %v744 = vmax.f32 %v684, %v728
      %v745 = vmax.f32 %v687, %v729
      %v746 = vmax.f32 %v692, %v730
      %v747 = vmax.f32 %v695, %v731
      %v748 = vmax.f32 %v700, %v732
      %v749 = vmax.f32 %v703, %v733
      %v750 = vmax.f32 %v708, %v734
      %v751 = vmax.f32 %v711, %v735
      %v752 = vmax.f32 %v716, %v736
      %v753 = vmax.f32 %v719, %v737
      %v754 = vld [vmem:[%s8] sm:$0xff]
      %v755 = vld [vmem:[%s8 + $0x8] sm:$0xff]
      %v756 = vld [vmem:[%s8 + $0x10] sm:$0xff]
      %v757 = vld [vmem:[%s8 + $0x18] sm:$0xff]
      %v758 = vld [vmem:[%s8 + $0x20] sm:$0xff]
      %v759 = vld [vmem:[%s8 + $0x28] sm:$0xff]
      %v760 = vld [vmem:[%s8 + $0x30] sm:$0xff]
      %v761 = vld [vmem:[%s8 + $0x38] sm:$0xff]
      %v762 = vld [vmem:[%s8 + $0x40] sm:$0xff]
      %v763 = vld [vmem:[%s8 + $0x48] sm:$0xff]
      %v764 = vld [vmem:[%s8 + $0x50] sm:$0xff]
      %v765 = vld [vmem:[%s8 + $0x58] sm:$0xff]
      %v766 = vld [vmem:[%s8 + $0x60] sm:$0xff]
      %v767 = vld [vmem:[%s8 + $0x68] sm:$0xff]
      %v768 = vld [vmem:[%s8 + $0x70] sm:$0xff]
      %v769 = vld [vmem:[%s8 + $0x78] sm:$0xff]
      %v770 = vld [vmem:[%s3] sm:$0xf]
      %v771 = vld [vmem:[%s3 + $0x4] sm:$0xf]
      %v772 = vld [vmem:[%s3 + $0x8] sm:$0xf]
      %v773 = vld [vmem:[%s3 + $0xc] sm:$0xf]
      %v774 = vld [vmem:[%s3 + $0x10] sm:$0xf]
      %v775 = vld [vmem:[%s3 + $0x14] sm:$0xf]
      %v776 = vld [vmem:[%s3 + $0x18] sm:$0xf]
      %v777 = vld [vmem:[%s3 + $0x1c] sm:$0xf]
      %v778 = vld [vmem:[%s3 + $0x20] sm:$0xf]
      %v779 = vld [vmem:[%s3 + $0x24] sm:$0xf]
      %v780 = vld [vmem:[%s3 + $0x28] sm:$0xf]
      %v781 = vld [vmem:[%s3 + $0x2c] sm:$0xf]
      %v782 = vld [vmem:[%s3 + $0x30] sm:$0xf]
      %v783 = vld [vmem:[%s3 + $0x34] sm:$0xf]
      %v784 = vld [vmem:[%s3 + $0x38] sm:$0xf]
      %v785 = vld [vmem:[%s3 + $0x3c] sm:$0xf]
      %v786 = vpack.c.bf16 %v739, %v738
      %v787 = vpack.c.bf16 %v741, %v740
      %v788 = vpack.c.bf16 %v743, %v742
      %v789 = vpack.c.bf16 %v745, %v744
      %v790 = vpack.c.bf16 %v747, %v746
      %v791 = vpack.c.bf16 %v749, %v748
      %v792 = vpack.c.bf16 %v751, %v750
      %v793 = vpack.c.bf16 %v753, %v752
      %795 = vset.pattern.permute.xlu0 0
      %796 = vperm.xlu0 %795, %v754
      %v797 = vpop.permute.xlu0 %796
      %800 = vset.pattern.permute.xlu0 0
      %801 = vperm.xlu0 %800, %v755
      %v802 = vpop.permute.xlu0 %801
      %805 = vset.pattern.permute.xlu0 0
      %806 = vperm.xlu0 %805, %v756
      %v807 = vpop.permute.xlu0 %806
      %810 = vset.pattern.permute.xlu0 0
      %811 = vperm.xlu0 %810, %v757
      %v812 = vpop.permute.xlu0 %811
      %815 = vset.pattern.permute.xlu0 0
      %816 = vperm.xlu0 %815, %v758
      %v817 = vpop.permute.xlu0 %816
      %820 = vset.pattern.permute.xlu0 0
      %821 = vperm.xlu0 %820, %v759
      %v822 = vpop.permute.xlu0 %821
      %825 = vset.pattern.permute.xlu0 0
      %826 = vperm.xlu0 %825, %v760
      %v827 = vpop.permute.xlu0 %826
      %830 = vset.pattern.permute.xlu0 0
      %831 = vperm.xlu0 %830, %v761
      %v832 = vpop.permute.xlu0 %831
      %835 = vset.pattern.permute.xlu0 0
      %836 = vperm.xlu0 %835, %v762
      %v837 = vpop.permute.xlu0 %836
      %840 = vset.pattern.permute.xlu0 0
      %841 = vperm.xlu0 %840, %v763
      %v842 = vpop.permute.xlu0 %841
      %845 = vset.pattern.permute.xlu0 0
      %846 = vperm.xlu0 %845, %v764
      %v847 = vpop.permute.xlu0 %846
      %850 = vset.pattern.permute.xlu0 0
      %851 = vperm.xlu0 %850, %v765
      %v852 = vpop.permute.xlu0 %851
      %855 = vset.pattern.permute.xlu0 0
      %856 = vperm.xlu0 %855, %v766
      %v857 = vpop.permute.xlu0 %856
      %860 = vset.pattern.permute.xlu0 0
      %861 = vperm.xlu0 %860, %v767
      %v862 = vpop.permute.xlu0 %861
      %865 = vset.pattern.permute.xlu0 0
      %866 = vperm.xlu0 %865, %v768
      %v867 = vpop.permute.xlu0 %866
      %870 = vset.pattern.permute.xlu0 0
      %871 = vperm.xlu0 %870, %v769
      %v872 = vpop.permute.xlu0 %871
      %v890 = vunpack.c.l.b16 %v770
      %v891 = vunpack.c.l.b16 %v771
      %v892 = vunpack.c.l.b16 %v772
      %v893 = vunpack.c.l.b16 %v773
      %v894 = vunpack.c.l.b16 %v774
      %v895 = vunpack.c.l.b16 %v775
      %v896 = vunpack.c.l.b16 %v776
      %v897 = vunpack.c.l.b16 %v777
      %v898 = vunpack.c.l.b16 %v778
      %v899 = vunpack.c.l.b16 %v779
      %v900 = vunpack.c.l.b16 %v780
      %v901 = vunpack.c.l.b16 %v781
      %v902 = vunpack.c.l.b16 %v782
      %v903 = vunpack.c.l.b16 %v783
      %v904 = vunpack.c.l.b16 %v784
      %v905 = vunpack.c.l.b16 %v785
      %v906 = vpack.c.b16 %v891, %v890
      %v907 = vpack.c.b16 %v893, %v892
      %v908 = vpack.c.b16 %v895, %v894
      %v909 = vpack.c.b16 %v897, %v896
      %v910 = vpack.c.b16 %v899, %v898
      %v911 = vpack.c.b16 %v901, %v900
      %v912 = vpack.c.b16 %v903, %v902
      %v913 = vpack.c.b16 %v905, %v904
      %922 = vmatprep.subr.bf16.mxu0 0
      %923 = vmatpush1.bf16.msra.mxu0 %v786
      %924 = vmatprep.subr.bf16.mxu0 0
      %925 = vmatpush1.bf16.msra.mxu0 %v787
      %926 = vmatprep.subr.bf16.mxu0 0
      %927 = vmatpush1.bf16.msra.mxu0 %v788
      %928 = vmatprep.subr.bf16.mxu0 0
      %929 = vmatpush1.bf16.msra.mxu0 %v789
      %930 = vmatprep.subr.bf16.mxu0 0
      %931 = vmatpush1.bf16.msra.mxu0 %v790
      %932 = vmatprep.subr.bf16.mxu0 0
      %933 = vmatpush1.bf16.msra.mxu0 %v791
      %934 = vmatprep.subr.bf16.mxu0 0
      %935 = vmatpush1.bf16.msra.mxu0 %v792
      %936 = vmatprep.subr.bf16.mxu0 0
      %937 = vmatpush1.bf16.msra.mxu0 %v793
      %938 = vmatprep.subr.bf16.mxu0 0
      %939 = vmatpush1.bf16.msra.mxu0 0
      %940 = vmatprep.subr.bf16.mxu0 0
      %941 = vmatpush1.bf16.msra.mxu0 0
      %942 = vmatprep.subr.bf16.mxu0 0
      %943 = vmatpush1.bf16.msra.mxu0 0
      %944 = vmatprep.subr.bf16.mxu0 0
      %945 = vmatpush1.bf16.msra.mxu0 0
      %946 = vmatprep.subr.bf16.mxu0 0
      %947 = vmatpush1.bf16.msra.mxu0 0
      %948 = vmatprep.subr.bf16.mxu0 0
      %949 = vmatpush1.bf16.msra.mxu0 0
      %950 = vmatprep.subr.bf16.mxu0 0
      %951 = vmatpush1.bf16.msra.mxu0 0
      %952 = vmatprep.subr.bf16.mxu0 0
      %953 = vmatpush1.bf16.msra.mxu0 0
      %954 = vmatprep.mubr.bf16.mxu0 0
      %955 = vmatmul.mubr.bf16.gmra.mrb[0].mxu0 %v906
      %v956 = vpop.f32.mrb[0].mxu0
      %v957 = vadd.f32 %v797, %v956
      %v958 = vpop.f32.mrb[0].mxu0
      %v959 = vpop.f32.mrb[0].mxu0
      %v960 = vadd.f32 %v802, %v959
      %v961 = vpop.f32.mrb[0].mxu0
      %962 = vmatprep.mubr.bf16.mxu0 0
      %963 = vmatmul.mubr.bf16.gmra.mrb[0].mxu0 %v907
      %v964 = vpop.f32.mrb[0].mxu0
      %v965 = vadd.f32 %v807, %v964
      %v966 = vpop.f32.mrb[0].mxu0
      %v967 = vpop.f32.mrb[0].mxu0
      %v968 = vadd.f32 %v812, %v967
      %v969 = vpop.f32.mrb[0].mxu0
      %970 = vmatprep.mubr.bf16.mxu0 0
      %971 = vmatmul.mubr.bf16.gmra.mrb[0].mxu0 %v908
      %v972 = vpop.f32.mrb[0].mxu0
      %v973 = vadd.f32 %v817, %v972
      %v974 = vpop.f32.mrb[0].mxu0
      %v975 = vpop.f32.mrb[0].mxu0
      %v976 = vadd.f32 %v822, %v975
      %v977 = vpop.f32.mrb[0].mxu0
      %978 = vmatprep.mubr.bf16.mxu0 0
      %979 = vmatmul.mubr.bf16.gmra.mrb[0].mxu0 %v909
      %v980 = vpop.f32.mrb[0].mxu0
      %v981 = vadd.f32 %v827, %v980
      %v982 = vpop.f32.mrb[0].mxu0
      %v983 = vpop.f32.mrb[0].mxu0
      %v984 = vadd.f32 %v832, %v983
      %v985 = vpop.f32.mrb[0].mxu0
      %986 = vmatprep.mubr.bf16.mxu0 0
      %987 = vmatmul.mubr.bf16.gmra.mrb[0].mxu0 %v910
      %v988 = vpop.f32.mrb[0].mxu0
      %v989 = vadd.f32 %v837, %v988
      %v990 = vpop.f32.mrb[0].mxu0
      %v991 = vpop.f32.mrb[0].mxu0
      %v992 = vadd.f32 %v842, %v991
      %v993 = vpop.f32.mrb[0].mxu0
      %994 = vmatprep.mubr.bf16.mxu0 0
      %995 = vmatmul.mubr.bf16.gmra.mrb[0].mxu0 %v911
      %v996 = vpop.f32.mrb[0].mxu0
      %v997 = vadd.f32 %v847, %v996
      %v998 = vpop.f32.mrb[0].mxu0
      %v999 = vpop.f32.mrb[0].mxu0
      %v1000 = vadd.f32 %v852, %v999
      %v1001 = vpop.f32.mrb[0].mxu0
      %1002 = vmatprep.mubr.bf16.mxu0 0
      %1003 = vmatmul.mubr.bf16.gmra.mrb[0].mxu0 %v912
      %v1004 = vpop.f32.mrb[0].mxu0
      %v1005 = vadd.f32 %v857, %v1004
      %v1006 = vpop.f32.mrb[0].mxu0
      %v1007 = vpop.f32.mrb[0].mxu0
      %v1008 = vadd.f32 %v862, %v1007
      %v1009 = vpop.f32.mrb[0].mxu0
      %1010 = vmatprep.mubr.bf16.mxu0 0
      %1011 = vmatmul.mubr.bf16.gmra.mrb[0].mxu0 %v913
      %v1012 = vpop.f32.mrb[0].mxu0
      %v1013 = vadd.f32 %v867, %v1012
      %v1014 = vpop.f32.mrb[0].mxu0
      %v1015 = vpop.f32.mrb[0].mxu0
      %v1016 = vadd.f32 %v872, %v1015
      %v1017 = vpop.f32.mrb[0].mxu0
      %1018 = vdwg.mxu0
      %v1019 = vmul.f32 %v957, 0.02
      %v1020 = vmul.f32 %v960, 0.02
      %v1021 = vmul.f32 %v965, 0.02
      %v1022 = vmul.f32 %v968, 0.02
      %v1023 = vmul.f32 %v973, 0.02
      %v1024 = vmul.f32 %v976, 0.02
      %v1025 = vmul.f32 %v981, 0.02
      %v1026 = vmul.f32 %v984, 0.02
      %v1027 = vmul.f32 %v989, 0.02
      %v1028 = vmul.f32 %v992, 0.02
      %v1029 = vmul.f32 %v997, 0.02
      %v1030 = vmul.f32 %v1000, 0.02
      %v1031 = vmul.f32 %v1005, 0.02
      %v1032 = vmul.f32 %v1008, 0.02
      %v1033 = vmul.f32 %v1013, 0.02
      %v1034 = vmul.f32 %v1016, 0.02
      %v1035 = vmax.f32 %v957, %v1019
      %v1036 = vmax.f32 %v960, %v1020
      %v1037 = vmax.f32 %v965, %v1021
      %v1038 = vmax.f32 %v968, %v1022
      %v1039 = vmax.f32 %v973, %v1023
      %v1040 = vmax.f32 %v976, %v1024
      %v1041 = vmax.f32 %v981, %v1025
      %v1042 = vmax.f32 %v984, %v1026
      %v1043 = vmax.f32 %v989, %v1027
      %v1044 = vmax.f32 %v992, %v1028
      %v1045 = vmax.f32 %v997, %v1029
      %v1046 = vmax.f32 %v1000, %v1030
      %v1047 = vmax.f32 %v1005, %v1031
      %v1048 = vmax.f32 %v1008, %v1032
      %v1049 = vmax.f32 %v1013, %v1033
      %v1050 = vmax.f32 %v1016, %v1034
      %v1051 = vld [vmem:[%s4] sm:$0xf]
      %v1052 = vld [vmem:[%s4 + $0x4] sm:$0xf]
      %v1053 = vld [vmem:[%s4 + $0x8] sm:$0xf]
      %v1054 = vld [vmem:[%s4 + $0xc] sm:$0xf]
      %v1055 = vld [vmem:[%s4 + $0x10] sm:$0xf]
      %v1056 = vld [vmem:[%s4 + $0x14] sm:$0xf]
      %v1057 = vld [vmem:[%s4 + $0x18] sm:$0xf]
      %v1058 = vld [vmem:[%s4 + $0x1c] sm:$0xf]
      %v1059 = vld [vmem:[%s4 + $0x20] sm:$0xf]
      %v1060 = vld [vmem:[%s4 + $0x24] sm:$0xf]
      %v1061 = vld [vmem:[%s4 + $0x28] sm:$0xf]
      %v1062 = vld [vmem:[%s4 + $0x2c] sm:$0xf]
      %v1063 = vld [vmem:[%s4 + $0x30] sm:$0xf]
      %v1064 = vld [vmem:[%s4 + $0x34] sm:$0xf]
      %v1065 = vld [vmem:[%s4 + $0x38] sm:$0xf]
      %v1066 = vld [vmem:[%s4 + $0x3c] sm:$0xf]
      %v1067 = vpack.c.bf16 %v1036, %v1035
      %v1068 = vpack.c.bf16 %v1038, %v1037
      %v1069 = vpack.c.bf16 %v1040, %v1039
      %v1070 = vpack.c.bf16 %v1042, %v1041
      %v1071 = vpack.c.bf16 %v1044, %v1043
      %v1072 = vpack.c.bf16 %v1046, %v1045
      %v1073 = vpack.c.bf16 %v1048, %v1047
      %v1074 = vpack.c.bf16 %v1050, %v1049
      %1075 = vset.pattern.permute.xlu0 1
      %1076 = vperm.xlu0 %1075, %v754
      %v1077 = vpop.permute.xlu0 %1076
      %1079 = vset.pattern.permute.xlu0 1
      %1080 = vperm.xlu0 %1079, %v755
      %v1081 = vpop.permute.xlu0 %1080
      %1083 = vset.pattern.permute.xlu0 1
      %1084 = vperm.xlu0 %1083, %v756
      %v1085 = vpop.permute.xlu0 %1084
      %1087 = vset.pattern.permute.xlu0 1
      %1088 = vperm.xlu0 %1087, %v757
      %v1089 = vpop.permute.xlu0 %1088
      %1091 = vset.pattern.permute.xlu0 1
      %1092 = vperm.xlu0 %1091, %v758
      %v1093 = vpop.permute.xlu0 %1092
      %1095 = vset.pattern.permute.xlu0 1
      %1096 = vperm.xlu0 %1095, %v759
      %v1097 = vpop.permute.xlu0 %1096
      %1099 = vset.pattern.permute.xlu0 1
      %1100 = vperm.xlu0 %1099, %v760
      %v1101 = vpop.permute.xlu0 %1100
      %1103 = vset.pattern.permute.xlu0 1
      %1104 = vperm.xlu0 %1103, %v761
      %v1105 = vpop.permute.xlu0 %1104
      %1107 = vset.pattern.permute.xlu0 1
      %1108 = vperm.xlu0 %1107, %v762
      %v1109 = vpop.permute.xlu0 %1108
      %1111 = vset.pattern.permute.xlu0 1
      %1112 = vperm.xlu0 %1111, %v763
      %v1113 = vpop.permute.xlu0 %1112
      %1115 = vset.pattern.permute.xlu0 1
      %1116 = vperm.xlu0 %1115, %v764
      %v1117 = vpop.permute.xlu0 %1116
      %1119 = vset.pattern.permute.xlu0 1
      %1120 = vperm.xlu0 %1119, %v765
      %v1121 = vpop.permute.xlu0 %1120
      %1123 = vset.pattern.permute.xlu0 1
      %1124 = vperm.xlu0 %1123, %v766
      %v1125 = vpop.permute.xlu0 %1124
      %1127 = vset.pattern.permute.xlu0 1
      %1128 = vperm.xlu0 %1127, %v767
      %v1129 = vpop.permute.xlu0 %1128
      %1131 = vset.pattern.permute.xlu0 1
      %1132 = vperm.xlu0 %1131, %v768
      %v1133 = vpop.permute.xlu0 %1132
      %1135 = vset.pattern.permute.xlu0 1
      %1136 = vperm.xlu0 %1135, %v769
      %v1137 = vpop.permute.xlu0 %1136
      %v1155 = vunpack.c.l.b16 %v1051
      %v1156 = vunpack.c.l.b16 %v1052
      %v1157 = vunpack.c.l.b16 %v1053
      %v1158 = vunpack.c.l.b16 %v1054
      %v1159 = vunpack.c.l.b16 %v1055
      %v1160 = vunpack.c.l.b16 %v1056
      %v1161 = vunpack.c.l.b16 %v1057
      %v1162 = vunpack.c.l.b16 %v1058
      %v1163 = vunpack.c.l.b16 %v1059
      %v1164 = vunpack.c.l.b16 %v1060
      %v1165 = vunpack.c.l.b16 %v1061
      %v1166 = vunpack.c.l.b16 %v1062
      %v1167 = vunpack.c.l.b16 %v1063
      %v1168 = vunpack.c.l.b16 %v1064
      %v1169 = vunpack.c.l.b16 %v1065
      %v1170 = vunpack.c.l.b16 %v1066
      %v1171 = vpack.c.b16 %v1156, %v1155
      %v1172 = vpack.c.b16 %v1158, %v1157
      %v1173 = vpack.c.b16 %v1160, %v1159
      %v1174 = vpack.c.b16 %v1162, %v1161
      %v1175 = vpack.c.b16 %v1164, %v1163
      %v1176 = vpack.c.b16 %v1166, %v1165
      %v1177 = vpack.c.b16 %v1168, %v1167
      %v1178 = vpack.c.b16 %v1170, %v1169
      %1187 = vmatprep.subr.bf16.mxu0 0
      %1188 = vmatpush1.bf16.msra.mxu0 %v1067
      %1189 = vmatprep.subr.bf16.mxu0 0
      %1190 = vmatpush1.bf16.msra.mxu0 %v1068
      %1191 = vmatprep.subr.bf16.mxu0 0
      %1192 = vmatpush1.bf16.msra.mxu0 %v1069
      %1193 = vmatprep.subr.bf16.mxu0 0
      %1194 = vmatpush1.bf16.msra.mxu0 %v1070
      %1195 = vmatprep.subr.bf16.mxu0 0
      %1196 = vmatpush1.bf16.msra.mxu0 %v1071
      %1197 = vmatprep.subr.bf16.mxu0 0
      %1198 = vmatpush1.bf16.msra.mxu0 %v1072
      %1199 = vmatprep.subr.bf16.mxu0 0
      %1200 = vmatpush1.bf16.msra.mxu0 %v1073
      %1201 = vmatprep.subr.bf16.mxu0 0
      %1202 = vmatpush1.bf16.msra.mxu0 %v1074
      %1203 = vmatprep.subr.bf16.mxu0 0
      %1204 = vmatpush1.bf16.msra.mxu0 0
      %1205 = vmatprep.subr.bf16.mxu0 0
      %1206 = vmatpush1.bf16.msra.mxu0 0
      %1207 = vmatprep.subr.bf16.mxu0 0
      %1208 = vmatpush1.bf16.msra.mxu0 0
      %1209 = vmatprep.subr.bf16.mxu0 0
      %1210 = vmatpush1.bf16.msra.mxu0 0
      %1211 = vmatprep.subr.bf16.mxu0 0
      %1212 = vmatpush1.bf16.msra.mxu0 0
      %1213 = vmatprep.subr.bf16.mxu0 0
      %1214 = vmatpush1.bf16.msra.mxu0 0
      %1215 = vmatprep.subr.bf16.mxu0 0
      %1216 = vmatpush1.bf16.msra.mxu0 0
      %1217 = vmatprep.subr.bf16.mxu0 0
      %1218 = vmatpush1.bf16.msra.mxu0 0
      %1219 = vmatprep.mubr.bf16.mxu0 0
      %1220 = vmatmul.mubr.bf16.gmra.mrb[0].mxu0 %v1171
      %v1221 = vpop.f32.mrb[0].mxu0
      %v1222 = vadd.f32 %v1077, %v1221
      %v1223 = vpop.f32.mrb[0].mxu0
      %v1224 = vpop.f32.mrb[0].mxu0
      %v1225 = vadd.f32 %v1081, %v1224
      %v1226 = vpop.f32.mrb[0].mxu0
      %1227 = vmatprep.mubr.bf16.mxu0 0
      %1228 = vmatmul.mubr.bf16.gmra.mrb[0].mxu0 %v1172
      %v1229 = vpop.f32.mrb[0].mxu0
      %v1230 = vadd.f32 %v1085, %v1229
      %v1231 = vpop.f32.mrb[0].mxu0
      %v1232 = vpop.f32.mrb[0].mxu0
      %v1233 = vadd.f32 %v1089, %v1232
      %v1234 = vpop.f32.mrb[0].mxu0
      %1235 = vmatprep.mubr.bf16.mxu0 0
      %1236 = vmatmul.mubr.bf16.gmra.mrb[0].mxu0 %v1173
      %v1237 = vpop.f32.mrb[0].mxu0
      %v1238 = vadd.f32 %v1093, %v1237
      %v1239 = vpop.f32.mrb[0].mxu0
      %v1240 = vpop.f32.mrb[0].mxu0
      %v1241 = vadd.f32 %v1097, %v1240
      %v1242 = vpop.f32.mrb[0].mxu0
      %1243 = vmatprep.mubr.bf16.mxu0 0
      %1244 = vmatmul.mubr.bf16.gmra.mrb[0].mxu0 %v1174
      %v1245 = vpop.f32.mrb[0].mxu0
      %v1246 = vadd.f32 %v1101, %v1245
      %v1247 = vpop.f32.mrb[0].mxu0
      %v1248 = vpop.f32.mrb[0].mxu0
      %v1249 = vadd.f32 %v1105, %v1248
      %v1250 = vpop.f32.mrb[0].mxu0
      %1251 = vmatprep.mubr.bf16.mxu0 0
      %1252 = vmatmul.mubr.bf16.gmra.mrb[0].mxu0 %v1175
      %v1253 = vpop.f32.mrb[0].mxu0
      %v1254 = vadd.f32 %v1109, %v1253
      %v1255 = vpop.f32.mrb[0].mxu0
      %v1256 = vpop.f32.mrb[0].mxu0
      %v1257 = vadd.f32 %v1113, %v1256
      %v1258 = vpop.f32.mrb[0].mxu0
      %1259 = vmatprep.mubr.bf16.mxu0 0
      %1260 = vmatmul.mubr.bf16.gmra.mrb[0].mxu0 %v1176
      %v1261 = vpop.f32.mrb[0].mxu0
      %v1262 = vadd.f32 %v1117, %v1261
      %v1263 = vpop.f32.mrb[0].mxu0
      %v1264 = vpop.f32.mrb[0].mxu0
      %v1265 = vadd.f32 %v1121, %v1264
      %v1266 = vpop.f32.mrb[0].mxu0
      %1267 = vmatprep.mubr.bf16.mxu0 0
      %1268 = vmatmul.mubr.bf16.gmra.mrb[0].mxu0 %v1177
      %v1269 = vpop.f32.mrb[0].mxu0
      %v1270 = vadd.f32 %v1125, %v1269
      %v1271 = vpop.f32.mrb[0].mxu0
      %v1272 = vpop.f32.mrb[0].mxu0
      %v1273 = vadd.f32 %v1129, %v1272
      %v1274 = vpop.f32.mrb[0].mxu0
      %1275 = vmatprep.mubr.bf16.mxu0 0
      %1276 = vmatmul.mubr.bf16.gmra.mrb[0].mxu0 %v1178
      %v1277 = vpop.f32.mrb[0].mxu0
      %v1278 = vadd.f32 %v1133, %v1277
      %v1279 = vpop.f32.mrb[0].mxu0
      %v1280 = vpop.f32.mrb[0].mxu0
      %v1281 = vadd.f32 %v1137, %v1280
      %v1282 = vpop.f32.mrb[0].mxu0
      %1283 = vdwg.mxu0
      %v1284 = vmul.f32 %v1222, 0.02
      %v1285 = vmul.f32 %v1225, 0.02
      %v1286 = vmul.f32 %v1230, 0.02
      %v1287 = vmul.f32 %v1233, 0.02
      %v1288 = vmul.f32 %v1238, 0.02
      %v1289 = vmul.f32 %v1241, 0.02
      %v1290 = vmul.f32 %v1246, 0.02
      %v1291 = vmul.f32 %v1249, 0.02
      %v1292 = vmul.f32 %v1254, 0.02
      %v1293 = vmul.f32 %v1257, 0.02
      %v1294 = vmul.f32 %v1262, 0.02
      %v1295 = vmul.f32 %v1265, 0.02
      %v1296 = vmul.f32 %v1270, 0.02
      %v1297 = vmul.f32 %v1273, 0.02
      %v1298 = vmul.f32 %v1278, 0.02
      %v1299 = vmul.f32 %v1281, 0.02
      %v1300 = vmax.f32 %v1222, %v1284
      %v1301 = vmax.f32 %v1225, %v1285
      %v1302 = vmax.f32 %v1230, %v1286
      %v1303 = vmax.f32 %v1233, %v1287
      %v1304 = vmax.f32 %v1238, %v1288
      %v1305 = vmax.f32 %v1241, %v1289
      %v1306 = vmax.f32 %v1246, %v1290
      %v1307 = vmax.f32 %v1249, %v1291
      %v1308 = vmax.f32 %v1254, %v1292
      %v1309 = vmax.f32 %v1257, %v1293
      %v1310 = vmax.f32 %v1262, %v1294
      %v1311 = vmax.f32 %v1265, %v1295
      %v1312 = vmax.f32 %v1270, %v1296
      %v1313 = vmax.f32 %v1273, %v1297
      %v1314 = vmax.f32 %v1278, %v1298
      %v1315 = vmax.f32 %v1281, %v1299
      %v1316 = vld [vmem:[%s5] sm:$0xf]
      %v1317 = vld [vmem:[%s5 + $0x4] sm:$0xf]
      %v1318 = vld [vmem:[%s5 + $0x8] sm:$0xf]
      %v1319 = vld [vmem:[%s5 + $0xc] sm:$0xf]
      %v1320 = vld [vmem:[%s5 + $0x10] sm:$0xf]
      %v1321 = vld [vmem:[%s5 + $0x14] sm:$0xf]
      %v1322 = vld [vmem:[%s5 + $0x18] sm:$0xf]
      %v1323 = vld [vmem:[%s5 + $0x1c] sm:$0xf]
      %v1324 = vpack.c.bf16 %v1301, %v1300
      %v1325 = vpack.c.bf16 %v1303, %v1302
      %v1326 = vpack.c.bf16 %v1305, %v1304
      %v1327 = vpack.c.bf16 %v1307, %v1306
      %v1328 = vpack.c.bf16 %v1309, %v1308
      %v1329 = vpack.c.bf16 %v1311, %v1310
      %v1330 = vpack.c.bf16 %v1313, %v1312
      %v1331 = vpack.c.bf16 %v1315, %v1314
      %1332 = vset.pattern.permute.xlu0 2
      %1333 = vperm.xlu0 %1332, %v754
      %v1334 = vpop.permute.xlu0 %1333
      %1336 = vset.pattern.permute.xlu0 2
      %1337 = vperm.xlu0 %1336, %v755
      %v1338 = vpop.permute.xlu0 %1337
      %1340 = vset.pattern.permute.xlu0 2
      %1341 = vperm.xlu0 %1340, %v756
      %v1342 = vpop.permute.xlu0 %1341
      %1344 = vset.pattern.permute.xlu0 2
      %1345 = vperm.xlu0 %1344, %v757
      %v1346 = vpop.permute.xlu0 %1345
      %1348 = vset.pattern.permute.xlu0 2
      %1349 = vperm.xlu0 %1348, %v758
      %v1350 = vpop.permute.xlu0 %1349
      %1352 = vset.pattern.permute.xlu0 2
      %1353 = vperm.xlu0 %1352, %v759
      %v1354 = vpop.permute.xlu0 %1353
      %1356 = vset.pattern.permute.xlu0 2
      %1357 = vperm.xlu0 %1356, %v760
      %v1358 = vpop.permute.xlu0 %1357
      %1360 = vset.pattern.permute.xlu0 2
      %1361 = vperm.xlu0 %1360, %v761
      %v1362 = vpop.permute.xlu0 %1361
      %v1372 = vunpack.c.l.b16 %v1316
      %v1373 = vunpack.c.l.b16 %v1317
      %v1374 = vunpack.c.l.b16 %v1318
      %v1375 = vunpack.c.l.b16 %v1319
      %v1376 = vunpack.c.l.b16 %v1320
      %v1377 = vunpack.c.l.b16 %v1321
      %v1378 = vunpack.c.l.b16 %v1322
      %v1379 = vunpack.c.l.b16 %v1323
      %v1380 = vpack.c.b16 %v1373, %v1372
      %v1381 = vpack.c.b16 %v1375, %v1374
      %v1382 = vpack.c.b16 %v1377, %v1376
      %v1383 = vpack.c.b16 %v1379, %v1378
      %1388 = vmatprep.subr.bf16.mxu0 0
      %1389 = vmatpush1.bf16.msra.mxu0 %v1324
      %1390 = vmatprep.subr.bf16.mxu0 0
      %1391 = vmatpush1.bf16.msra.mxu0 %v1325
      %1392 = vmatprep.subr.bf16.mxu0 0
      %1393 = vmatpush1.bf16.msra.mxu0 %v1326
      %1394 = vmatprep.subr.bf16.mxu0 0
      %1395 = vmatpush1.bf16.msra.mxu0 %v1327
      %1396 = vmatprep.subr.bf16.mxu0 0
      %1397 = vmatpush1.bf16.msra.mxu0 %v1328
      %1398 = vmatprep.subr.bf16.mxu0 0
      %1399 = vmatpush1.bf16.msra.mxu0 %v1329
      %1400 = vmatprep.subr.bf16.mxu0 0
      %1401 = vmatpush1.bf16.msra.mxu0 %v1330
      %1402 = vmatprep.subr.bf16.mxu0 0
      %1403 = vmatpush1.bf16.msra.mxu0 %v1331
      %1404 = vmatprep.subr.bf16.mxu0 0
      %1405 = vmatpush1.bf16.msra.mxu0 0
      %1406 = vmatprep.subr.bf16.mxu0 0
      %1407 = vmatpush1.bf16.msra.mxu0 0
      %1408 = vmatprep.subr.bf16.mxu0 0
      %1409 = vmatpush1.bf16.msra.mxu0 0
      %1410 = vmatprep.subr.bf16.mxu0 0
      %1411 = vmatpush1.bf16.msra.mxu0 0
      %1412 = vmatprep.subr.bf16.mxu0 0
      %1413 = vmatpush1.bf16.msra.mxu0 0
      %1414 = vmatprep.subr.bf16.mxu0 0
      %1415 = vmatpush1.bf16.msra.mxu0 0
      %1416 = vmatprep.subr.bf16.mxu0 0
      %1417 = vmatpush1.bf16.msra.mxu0 0
      %1418 = vmatprep.subr.bf16.mxu0 0
      %1419 = vmatpush1.bf16.msra.mxu0 0
      %1420 = vmatprep.mubr.bf16.mxu0 0
      %1421 = vmatmul.mubr.bf16.gmra.mrb[0].mxu0 %v1380
      %v1422 = vpop.f32.mrb[0].mxu0
      %v1423 = vadd.f32 %v1334, %v1422
      %v1424 = vpop.f32.mrb[0].mxu0
      %v1425 = vpop.f32.mrb[0].mxu0
      %v1426 = vadd.f32 %v1338, %v1425
      %v1427 = vpop.f32.mrb[0].mxu0
      %1428 = vmatprep.mubr.bf16.mxu0 0
      %1429 = vmatmul.mubr.bf16.gmra.mrb[0].mxu0 %v1381
      %v1430 = vpop.f32.mrb[0].mxu0
      %v1431 = vadd.f32 %v1342, %v1430
      %v1432 = vpop.f32.mrb[0].mxu0
      %v1433 = vpop.f32.mrb[0].mxu0
      %v1434 = vadd.f32 %v1346, %v1433
      %v1435 = vpop.f32.mrb[0].mxu0
      %1436 = vmatprep.mubr.bf16.mxu0 0
      %1437 = vmatmul.mubr.bf16.gmra.mrb[0].mxu0 %v1382
      %v1438 = vpop.f32.mrb[0].mxu0
      %v1439 = vadd.f32 %v1350, %v1438
      %v1440 = vpop.f32.mrb[0].mxu0
      %v1441 = vpop.f32.mrb[0].mxu0
      %v1442 = vadd.f32 %v1354, %v1441
      %v1443 = vpop.f32.mrb[0].mxu0
      %1444 = vmatprep.mubr.bf16.mxu0 0
      %1445 = vmatmul.mubr.bf16.gmra.mrb[0].mxu0 %v1383
      %v1446 = vpop.f32.mrb[0].mxu0
      %v1447 = vadd.f32 %v1358, %v1446
      %v1448 = vpop.f32.mrb[0].mxu0
      %v1449 = vpop.f32.mrb[0].mxu0
      %v1450 = vadd.f32 %v1362, %v1449
      %v1451 = vpop.f32.mrb[0].mxu0
      %1452 = vdwg.mxu0
      %v1453 = vmul.f32 %v1423, 0.02
      %v1454 = vmul.f32 %v1426, 0.02
      %v1455 = vmul.f32 %v1431, 0.02
      %v1456 = vmul.f32 %v1434, 0.02
      %v1457 = vmul.f32 %v1439, 0.02
      %v1458 = vmul.f32 %v1442, 0.02
      %v1459 = vmul.f32 %v1447, 0.02
      %v1460 = vmul.f32 %v1450, 0.02
      %v1461 = vmax.f32 %v1423, %v1453
      %v1462 = vmax.f32 %v1426, %v1454
      %v1463 = vmax.f32 %v1431, %v1455
      %v1464 = vmax.f32 %v1434, %v1456
      %v1465 = vmax.f32 %v1439, %v1457
      %v1466 = vmax.f32 %v1442, %v1458
      %v1467 = vmax.f32 %v1447, %v1459
      %v1468 = vmax.f32 %v1450, %v1460
      %v1469 = vld [vmem:[%s6] sm:$0xf]
      %v1470 = vld [vmem:[%s6 + $0x4] sm:$0xf]
      %v1471 = vld [vmem:[%s6 + $0x8] sm:$0xf]
      %v1472 = vld [vmem:[%s6 + $0xc] sm:$0xf]
      %v1473 = vpack.c.bf16 %v1462, %v1461
      %v1474 = vpack.c.bf16 %v1464, %v1463
      %v1475 = vpack.c.bf16 %v1466, %v1465
      %v1476 = vpack.c.bf16 %v1468, %v1467
      %1477 = vset.pattern.permute.xlu0 3
      %1478 = vperm.xlu0 %1477, %v754
      %v1479 = vpop.permute.xlu0 %1478
      %1481 = vset.pattern.permute.xlu0 3
      %1482 = vperm.xlu0 %1481, %v755
      %v1483 = vpop.permute.xlu0 %1482
      %1485 = vset.pattern.permute.xlu0 3
      %1486 = vperm.xlu0 %1485, %v756
      %v1487 = vpop.permute.xlu0 %1486
      %1489 = vset.pattern.permute.xlu0 3
      %1490 = vperm.xlu0 %1489, %v757
      %v1491 = vpop.permute.xlu0 %1490
      %v1497 = vunpack.c.l.b16 %v1469
      %v1498 = vunpack.c.l.b16 %v1470
      %v1499 = vunpack.c.l.b16 %v1471
      %v1500 = vunpack.c.l.b16 %v1472
      %v1501 = vpack.c.b16 %v1498, %v1497
      %v1502 = vpack.c.b16 %v1500, %v1499
      %vm1503 = vcmask 523264
      %v1505 = vsel %vm1503, %v1501, 0
      %v1508 = vsel %vm1503, %v1502, 0
      %1510 = vmatprep.subr.bf16.mxu0 0
      %1511 = vmatpush1.bf16.msra.mxu0 %v1473
      %1512 = vmatprep.subr.bf16.mxu0 0
      %1513 = vmatpush1.bf16.msra.mxu0 %v1474
      %1514 = vmatprep.subr.bf16.mxu0 0
      %1515 = vmatpush1.bf16.msra.mxu0 %v1475
      %1516 = vmatprep.subr.bf16.mxu0 0
      %1517 = vmatpush1.bf16.msra.mxu0 %v1476
      %1518 = vmatprep.subr.bf16.mxu0 0
      %1519 = vmatpush1.bf16.msra.mxu0 0
      %1520 = vmatprep.subr.bf16.mxu0 0
      %1521 = vmatpush1.bf16.msra.mxu0 0
      %1522 = vmatprep.subr.bf16.mxu0 0
      %1523 = vmatpush1.bf16.msra.mxu0 0
      %1524 = vmatprep.subr.bf16.mxu0 0
      %1525 = vmatpush1.bf16.msra.mxu0 0
      %1526 = vmatprep.subr.bf16.mxu0 0
      %1527 = vmatpush1.bf16.msra.mxu0 0
      %1528 = vmatprep.subr.bf16.mxu0 0
      %1529 = vmatpush1.bf16.msra.mxu0 0
      %1530 = vmatprep.subr.bf16.mxu0 0
      %1531 = vmatpush1.bf16.msra.mxu0 0
      %1532 = vmatprep.subr.bf16.mxu0 0
      %1533 = vmatpush1.bf16.msra.mxu0 0
      %1534 = vmatprep.subr.bf16.mxu0 0
      %1535 = vmatpush1.bf16.msra.mxu0 0
      %1536 = vmatprep.subr.bf16.mxu0 0
      %1537 = vmatpush1.bf16.msra.mxu0 0
      %1538 = vmatprep.subr.bf16.mxu0 0
      %1539 = vmatpush1.bf16.msra.mxu0 0
      %1540 = vmatprep.subr.bf16.mxu0 0
      %1541 = vmatpush1.bf16.msra.mxu0 0
      %1542 = vmatprep.mubr.bf16.mxu0 0
      %1543 = vmatmul.mubr.bf16.gmra.mrb[0].mxu0 %v1505
      %v1544 = vpop.f32.mrb[0].mxu0
      %v1545 = vadd.f32 %v1479, %v1544
      %v1546 = vpop.f32.mrb[0].mxu0
      %v1547 = vpop.f32.mrb[0].mxu0
      %v1548 = vadd.f32 %v1483, %v1547
      %v1549 = vpop.f32.mrb[0].mxu0
      %1550 = vmatprep.mubr.bf16.mxu0 0
      %1551 = vmatmul.mubr.bf16.gmra.mrb[0].mxu0 %v1508
      %v1552 = vpop.f32.mrb[0].mxu0
      %v1553 = vadd.f32 %v1487, %v1552
      %v1554 = vpop.f32.mrb[0].mxu0
      %v1555 = vpop.f32.mrb[0].mxu0
      %v1556 = vadd.f32 %v1491, %v1555
      %v1557 = vpop.f32.mrb[0].mxu0
      %1558 = vdwg.mxu0
      %v1559 = vmul.f32 %v1545, 0.02
      %v1560 = vmul.f32 %v1548, 0.02
      %v1561 = vmul.f32 %v1553, 0.02
      %v1562 = vmul.f32 %v1556, 0.02
      %v1563 = vmax.f32 %v1545, %v1559
      %v1564 = vmax.f32 %v1548, %v1560
      %v1565 = vmax.f32 %v1553, %v1561
      %v1566 = vmax.f32 %v1556, %v1562
      %v1567 = vld [vmem:[%s7] sm:$0xf]
      %v1568 = vld [vmem:[%s7 + $0x4] sm:$0xf]
      %v1569 = vpack.c.bf16 %v1564, %v1563
      %v1570 = vpack.c.bf16 %v1566, %v1565
      %1571 = vset.pattern.permute.xlu0 4
      %1572 = vperm.xlu0 %1571, %v754
      %v1573 = vpop.permute.xlu0 %1572
      %1575 = vset.pattern.permute.xlu0 4
      %1576 = vperm.xlu0 %1575, %v755
      %v1577 = vpop.permute.xlu0 %1576
      %v1581 = vunpack.c.l.b16 %v1567
      %v1582 = vunpack.c.l.b16 %v1568
      %v1583 = vpack.c.b16 %v1582, %v1581
      %vm1584 = vcmask 261120
      %v1586 = vsel %vm1584, %v1583, 0
      %1588 = vmatprep.subr.bf16.mxu0 0
      %1589 = vmatpush1.bf16.msra.mxu0 %v1569
      %1590 = vmatprep.subr.bf16.mxu0 0
      %1591 = vmatpush1.bf16.msra.mxu0 %v1570
      %1592 = vmatprep.subr.bf16.mxu0 0
      %1593 = vmatpush1.bf16.msra.mxu0 0
      %1594 = vmatprep.subr.bf16.mxu0 0
      %1595 = vmatpush1.bf16.msra.mxu0 0
      %1596 = vmatprep.subr.bf16.mxu0 0
      %1597 = vmatpush1.bf16.msra.mxu0 0
      %1598 = vmatprep.subr.bf16.mxu0 0
      %1599 = vmatpush1.bf16.msra.mxu0 0
      %1600 = vmatprep.subr.bf16.mxu0 0
      %1601 = vmatpush1.bf16.msra.mxu0 0
      %1602 = vmatprep.subr.bf16.mxu0 0
      %1603 = vmatpush1.bf16.msra.mxu0 0
      %1604 = vmatprep.subr.bf16.mxu0 0
      %1605 = vmatpush1.bf16.msra.mxu0 0
      %1606 = vmatprep.subr.bf16.mxu0 0
      %1607 = vmatpush1.bf16.msra.mxu0 0
      %1608 = vmatprep.subr.bf16.mxu0 0
      %1609 = vmatpush1.bf16.msra.mxu0 0
      %1610 = vmatprep.subr.bf16.mxu0 0
      %1611 = vmatpush1.bf16.msra.mxu0 0
      %1612 = vmatprep.subr.bf16.mxu0 0
      %1613 = vmatpush1.bf16.msra.mxu0 0
      %1614 = vmatprep.subr.bf16.mxu0 0
      %1615 = vmatpush1.bf16.msra.mxu0 0
      %1616 = vmatprep.subr.bf16.mxu0 0
      %1617 = vmatpush1.bf16.msra.mxu0 0
      %1618 = vmatprep.subr.bf16.mxu0 0
      %1619 = vmatpush1.bf16.msra.mxu0 0
      %1620 = vmatprep.mubr.bf16.mxu0 0
      %1621 = vmatmul.mubr.bf16.gmra.mrb[0].mxu0 %v1586
      %v1622 = vpop.f32.mrb[0].mxu0
      %v1623 = vadd.f32 %v1573, %v1622
      %v1624 = vpop.f32.mrb[0].mxu0
      %v1625 = vpop.f32.mrb[0].mxu0
      %v1626 = vadd.f32 %v1577, %v1625
      %v1627 = vpop.f32.mrb[0].mxu0
      %1628 = vdwg.mxu0
      %v1629 = vmul.f32 %v1623, 0.02
      %v1630 = vmul.f32 %v1626, 0.02
      %v1631 = vmax.f32 %v1623, %v1629
      %v1632 = vmax.f32 %v1626, %v1630
      %v1633 = vld [vmem:[%s9] sm:$0xff]
      %v1634 = vld [vmem:[%s9 + $0x8] sm:$0xff]
      %1636 = vset.pattern.permute.xlu0 0
      %1637 = vperm.xlu0 %1636, %v1633
      %v1638 = vpop.permute.xlu0 %1637
      %1641 = vset.pattern.permute.xlu0 0
      %1642 = vperm.xlu0 %1641, %v1634
      %v1643 = vpop.permute.xlu0 %1642
      %v1645 = vmul.f32 %v1631, %v1638
      %v1646 = vmul.f32 %v1632, %v1643
      %v1647 = vadd.f32 %v1645, %v1646
      %v1648 = vrot.slane %v1647, 4
      %v1649 = vadd.f32 %v1647, %v1648
      %v1650 = vrot.slane %v1649, 2
      %v1651 = vadd.f32 %v1649, %v1650
      %v1652 = vrot.slane %v1651, 1
      %v1653 = vadd.f32 %v1651, %v1652
      %v1654 = vld [vmem:[#allocation2] sm:$0x1]
      %1656 = vset.pattern.permute.xlu0 0
      %1657 = vperm.xlu0 %1656, %v1654
      %v1658 = vpop.permute.xlu0 %1657
      %v1660 = vlaneseq
      %v1661 = vshrl.u32 %v1660, 7
      %v1662 = vsub.s32 0, %v1661
      %v1663 = vrot.slane %v1658, %v1662
      %v1664 = vadd.f32 %v1653, %v1663
      %v1665 = vmul.f32 %v1664, 0.01
      %v1666 = vadd.f32 %v1665, 0.99
      %v1667 = vmin.f32 %v1664, %v1666
      %v1668 = vmax.f32 %v1667, %v1665
      %1669 = vst [vmem:[%s437] sm:$0x1] %v1668
      %p1670 = scmp.lt.s32.totalorder %s28, 1
      %s1671 = scalar_select %p1670, %s28, 1
      %p1672 = scmp.lt.s32.totalorder %s29, 1
      %s1673 = scalar_select %p1672, %s29, 1
      %s1674 = smul.addr %s1671, 2
      %s1675 = sadd.s32 %s1673, %s1674
      %s1676 = scalar_lea.vmem %s11, %s1675
      // Predicated region
      $region65: #{generator_forward.1} parent=63 // pred_check
        %p1677 = pneg %p299
      $region66: #{generator_forward.1} parent=63 // pred_check_branch
        %1679 = sbr.rel (%p1677) target = $region68
      $region67: #{generator_forward.1} parent=63 // pred_region
        _
      $region68: #{generator_forward.1} parent=63 // pred_fallthru
        _
    $region64: #{generator_forward.1} parent=5 // pred_fallthru
      _
    %p1680 = scmp.le.s32.totalorder 2, %s19
    // Predicated region
    $region69: #{generator_forward.1} parent=5 // pred_check
      %p1681 = pneg %p1680
    $region70: #{generator_forward.1} parent=5 // pred_check_branch
      %1683 = sbr.rel (%p1681) target = $region72
    $region71: #{generator_forward.1} parent=5 // pred_region
      %s1684 = ssub.s32 %s19, 2
      // Predicated region
      $region73: #{generator_forward.1} parent=71 // pred_check
        %p1685 = pneg %p305
      $region74: #{generator_forward.1} parent=71 // pred_check_branch
        %1687 = sbr.rel (%p1685) target = $region76
      $region75: #{generator_forward.1} parent=71 // pred_region
        %p1688 = scmp.lt.s32.totalorder %s30, 1
        %s1689 = scalar_select %p1688, %s30, 1
        %p1690 = scmp.lt.s32.totalorder %s31, 1
        %s1691 = scalar_select %p1690, %s31, 1
        %s1692 = smul.addr %s1689, 2
        %s1693 = sadd.s32 %s1691, %s1692
        %s1694 = scalar_lea.vmem %s11, %s1693
      $region76: #{generator_forward.1} parent=71 // pred_fallthru
        _
    $region72: #{generator_forward.1} parent=5 // pred_fallthru
      _
  $region6: #{generator_forward.1} parent=0 // loop_footer
    %s23 = sadd.s32 1, %s19
  $region7: #{generator_forward.1} parent=0 // loop_footer_branch
    %18 = sbr.rel target = $region3
  $region8: #{generator_forward.1} parent=0 // loop_exit
    _

</llo_original>
